<compile_context>
chip_gen: v7x
topology: tpu7x:2x2x1
jax: 0.10.0
libtpu: 0.0.40
codegen_flags: <defaults>
</compile_context>

<pallas_src>
import jax
import jax.numpy as jnp
from jax.experimental import pallas as pl
from jax.experimental.pallas import tpu as pltpu

HIDDEN = 32                 # hidden width of the synthetic wrapped block
LANES = 128                 # TPU vreg lane width
TARGET_TILE = 1024          # slab rows per grid step (1024*128*4B = 512 KiB/buffer)
MIN_KERNEL_SLAB_ROWS = 64   # below this (= 256 tokens) plain XLA fusion wins


def _round_up(n, m):
    return pl.cdiv(n, m) * m


def _num_tensorcores():
    """TensorCores per chip (2 on v7x, else 1); robust to API differences."""
    try:
        info = pltpu.get_tpu_info()
        for attr in ("num_cores", "core_count", "num_tensorcores", "tensorcore_count"):
            v = getattr(info, attr, None)
            if isinstance(v, int) and v > 0:
                return v
    except Exception:
        pass
    try:
        kind = jax.devices()[0].device_kind.lower()
        if "v7" in kind:
            return 2
    except Exception:
        pass
    return 1


def _use_bf16_mxu():
    """Pin one-pass bf16 matmul on v5-class chips (f32 is multi-pass there)."""
    try:
        kind = jax.devices()[0].device_kind.lower()
        return "v5" in kind
    except Exception:
        return False


_NUM_CORES = _num_tensorcores()
_BF16_MXU = _use_bf16_mxu()


def _make_kernels(use_bf16):
    def _mm(x, w):
        if use_bf16:
            x = x.astype(jnp.bfloat16)
            w = w.astype(jnp.bfloat16)
        return jnp.dot(x, w, preferred_element_type=jnp.float32)

    def fwd(x_ref, w_ref, b_ref, hid_ref):
        # x_ref: (tile, 128) lane-dense slab; w_ref: (128, 128) block-diag weight.
        h = _mm(x_ref[...], w_ref[...]) + b_ref[...]
        hid_ref[...] = h.astype(hid_ref.dtype)

    def fwd_steered(x_ref, w_ref, b_ref, add_ref, hid_ref, out_ref):
        h = _mm(x_ref[...], w_ref[...]) + b_ref[...]
        hid_ref[...] = h.astype(hid_ref.dtype)                    # raw block output[0]
        out_ref[...] = (h + add_ref[...]).astype(out_ref.dtype)   # steered output

    def fwd_steered_only(x_ref, w_ref, b_ref, add_ref, out_ref):
        h = _mm(x_ref[...], w_ref[...]) + b_ref[...]
        out_ref[...] = (h + add_ref[...]).astype(out_ref.dtype)

    return fwd, fwd_steered, fwd_steered_only


_FWD_K, _STEER_K, _STEER_ONLY_K = _make_kernels(_BF16_MXU)


def _pick_tile(slab_rows, num_cores):
    rows = _round_up(max(slab_rows, 8), 8)
    if num_cores <= 1 or rows <= 8:
        # Single TensorCore (v5e / v6e): biggest tile, no megacore split.
        return min(TARGET_TILE, rows)
    # Dual-TC v7x: aim for an even number of grid steps and >= 4 total so each
    # core keeps >= 2 tiles in flight (per-core prefetch/writeback overlap).
    steps = pl.cdiv(rows, TARGET_TILE)
    steps = max(4, steps + (steps % 2))
    return max(8, min(TARGET_TILE, _round_up(pl.cdiv(rows, steps), 8)))


def block_wrapper_forward(x, w_big, b_big, add_big=None, *, store_last_hidden=True):
    """Fused block forward (+ optional steering add) via a Pallas kernel.

    x:       (B, S, H) float32 activations
    w_big:   (128, 128) block-diagonal expansion of the (H, H) block weight
    b_big:   (1, 128) lane-tiled bias
    add_big: (1, 128) lane-tiled steering vector, or None

    Returns  hidden                     if add_big is None
             (hidden, steered)          if add_big is set and store_last_hidden
             steered                    if add_big is set and not store_last_hidden
    """
    B, S, H = x.shape
    assert LANES % H == 0, "hidden width must divide 128 for lane packing"
    assert x.dtype == jnp.float32, "slab packing assumes 4-byte (f32) elements"
    rep = LANES // H
    M = B * S

    # Lane-dense slab: each 128-lane row carries `rep` consecutive hidden rows.
    # Pad only to whole 8-row sublane slabs (<= 8*rep-1 tokens, usually 0).
    # NO tile-granularity padding: the last grid block is ragged and Pallas
    # masks its out-of-range rows on writeback.
    pad_tokens = (-M) % (rep * 8)
    x2 = x.reshape(M, H)
    if pad_tokens:
        x2 = jnp.pad(x2, ((0, pad_tokens), (0, 0)))
    m_pad = M + pad_tokens
    slab_rows = m_pad // rep
    x_slab = x2.reshape(slab_rows, LANES)

    tile = _pick_tile(slab_rows, _NUM_CORES)
    grid = (pl.cdiv(slab_rows, tile),)

    row_spec = pl.BlockSpec((tile, LANES), lambda i: (i, 0))
    w_spec = pl.BlockSpec((LANES, LANES), lambda i: (0, 0))   # VMEM-resident
    vec_spec = pl.BlockSpec((1, LANES), lambda i: (0, 0))     # VMEM-resident
    cparams = pltpu.CompilerParams(
        dimension_semantics=("parallel",),
        vmem_limit_bytes=32 * 1024 * 1024,
    )
    out_sds = jax.ShapeDtypeStruct((slab_rows, LANES), x.dtype)

    def unslab(slab):
        y = slab.reshape(m_pad, H)
        if pad_tokens:
            y = y[:M]
        return y.reshape(B, S, H)

    if add_big is None:
        # Unsteered fast path: single output, no wasted HBM writeback.
        hid_slab = pl.pallas_call(
            _FWD_K,
            out_shape=out_sds,
            grid_spec=pl.GridSpec(
                grid=grid,
                in_specs=[row_spec, w_spec, vec_spec],
                out_specs=row_spec,
            ),
            compiler_params=cparams,
        )(x_slab, w_big, b_big)
        return unslab(hid_slab)

    if store_last_hidden:
        hid_slab, out_slab = pl.pallas_call(
            _STEER_K,
            out_shape=(out_sds, out_sds),
            grid_spec=pl.GridSpec(
                grid=grid,
                in_specs=[row_spec, w_spec, vec_spec, vec_spec],
                out_specs=[row_spec, row_spec],
            ),
            compiler_params=cparams,
        )(x_slab, w_big, b_big, add_big)
        return unslab(hid_slab), unslab(out_slab)

    out_slab = pl.pallas_call(
        _STEER_ONLY_K,
        out_shape=out_sds,
        grid_spec=pl.GridSpec(
            grid=grid,
            in_specs=[row_spec, w_spec, vec_spec, vec_spec],
            out_specs=row_spec,
        ),
        compiler_params=cparams,
    )(x_slab, w_big, b_big, add_big)
    return unslab(out_slab)


class BlockOutputWrapper:
    """JAX/Pallas port of the PyTorch BlockOutputWrapper.

    The wrapped block is a synthetic linear block returning (x @ W + b, aux);
    `aux` (None here) stands in for output[1:] of a real transformer block.
    """
    # TODO(synk): the original wraps an arbitrary nn.Module block; here the
    # block is a fixed linear layer so it can be fused into the Pallas kernel.

    def __init__(self, w, b, *, store_last_hidden=True):
        H = w.shape[0]
        assert LANES % H == 0
        self._rep = LANES // H
        self.w = w
        self.b = b
        # store_last_hidden=False is an opt-in perf knob: the steered kernel
        # then skips the raw-hidden HBM writeback (last_hidden_state unset).
        self._store_last_hidden = store_last_hidden
        # Expand params once so the kernel runs fully lane-dense:
        #   block-diagonal (128,128) weight, lane-tiled (1,128) bias.
        self._w_big = jnp.kron(jnp.eye(self._rep, dtype=w.dtype), w)
        self._b_big = jnp.tile(b.reshape(1, H), (1, self._rep))
        self._add_big = None
        self.last_hidden_state = None
        self.add_activations = None

    def _block_xla(self, x):
        # Tiny-input bypass: plain XLA fusion of the synthetic block.
        B, S, H = x.shape
        return (x.reshape(B * S, H) @ self.w + self.b).reshape(B, S, H)

    def __call__(self, x):
        B, S, H = x.shape
        if pl.cdiv(B * S, self._rep) < MIN_KERNEL_SLAB_ROWS:
            hidden = self._block_xla(x)
            self.last_hidden_state = hidden                 # output[0] of the block
            if self.add_activations is None:
                return (hidden, None)
            return (hidden + self.add_activations, None)    # (output[0]+add,) + output[1:]

        if self.add_activations is None:
            hidden = block_wrapper_forward(x, self._w_big, self._b_big)
            self.last_hidden_state = hidden
            return (hidden, None)

        if self._store_last_hidden:
            hidden, steered = block_wrapper_forward(
                x, self._w_big, self._b_big, self._add_big)
            self.last_hidden_state = hidden                 # raw output[0]
            return (steered, None)

        steered = block_wrapper_forward(
            x, self._w_big, self._b_big, self._add_big, store_last_hidden=False)
        self.last_hidden_state = None  # writeback skipped (opt-in perf mode)
        return (steered, None)

    def add(self, activations):
        H = self.w.shape[0]
        act = jnp.asarray(activations).reshape(-1)
        assert act.shape[0] == H, "steering vector must have exactly H elements"
        self.add_activations = act
        self._add_big = jnp.tile(act.reshape(1, H), (1, self._rep))

    def reset(self):
        self.last_hidden_state = None
        self.add_activations = None
        self._add_big = None


if __name__ == "__main__":
    key = jax.random.PRNGKey(0)
    kx1, kx2, kx3, kw, kb, ka = jax.random.split(key, 6)

    H = HIDDEN
    w = jax.random.normal(kw, (H, H), dtype=jnp.float32) * 0.05
    b = jax.random.normal(kb, (H,), dtype=jnp.float32) * 0.01
    steer = jax.random.normal(ka, (H,), dtype=jnp.float32)

    # bf16 one-pass MXU (v5-class) -> looser tolerance; otherwise tight.
    tol = dict(atol=3e-2, rtol=3e-2) if _BF16_MXU else dict(atol=1e-4, rtol=1e-4)

    def ref_block(x):
        return (x.reshape(-1, H) @ w + b).reshape(x.shape)

    wrapper = BlockOutputWrapper(w, b)

    # --- Case A: decode-sized input (SMALL shape) -> tiny-input XLA bypass. ---
    xa = jax.random.normal(kx1, (2, 8, H), dtype=jnp.float32)
    refa = ref_block(xa)
    outA, _ = wrapper(xa)
    outA = jax.block_until_ready(outA)
    assert jnp.allclose(outA, refa, **tol)
    assert jnp.allclose(wrapper.last_hidden_state, refa, **tol)
    wrapper.add(steer)
    outA2, _ = wrapper(xa)
    outA2 = jax.block_until_ready(outA2)
    assert jnp.allclose(outA2, refa + steer, **tol)
    assert jnp.allclose(wrapper.last_hidden_state, refa, **tol)
    wrapper.reset()

    # --- Case B: larger input -> Pallas kernel (multi-step grid, ragged last block). ---
    xb = jax.random.normal(kx2, (8, 640, H), dtype=jnp.float32)
    refb = ref_block(xb)
    outB, _ = wrapper(xb)                      # unsteered fast path
    outB = jax.block_until_ready(outB)
    assert jnp.allclose(outB, refb, **tol)
    assert jnp.allclose(wrapper.last_hidden_state, refb, **tol)
    wrapper.add(steer)
    outB2, _ = wrapper(xb)                     # steered dual-output path
    outB2 = jax.block_until_ready(outB2)
    assert jnp.allclose(outB2, refb + steer, **tol)
    assert jnp.allclose(wrapper.last_hidden_state, refb, **tol)
    wrapper.reset()

    # --- Case C: ragged token count -> 8-sublane-row pad path in the kernel. ---
    xc = jax.random.normal(kx3, (3, 100, H), dtype=jnp.float32)
    refc = ref_block(xc)
    wrapper.add(steer)
    outC, _ = wrapper(xc)
    outC = jax.block_until_ready(outC)
    assert jnp.allclose(outC, refc + steer, **tol)
    assert jnp.allclose(wrapper.last_hidden_state, refc, **tol)

    wrapper.reset()
    assert wrapper.last_hidden_state is None
    assert wrapper.add_activations is None

    print("KERNEL_OK")
</pallas_src>

<mosaic_0001>
module attributes {stable_mosaic.version = 11 : i64} {
  func.func @fwd(%arg0: i32, %arg1: memref<1024x128xf32, #tpu.memory_space<vmem>>, %arg2: memref<128x128xf32, #tpu.memory_space<vmem>>, %arg3: memref<1x128xf32, #tpu.memory_space<vmem>>, %arg4: memref<1024x128xf32, #tpu.memory_space<vmem>>) attributes {dimension_semantics = [#tpu.dimension_semantics<parallel>], iteration_bounds = array<i64: 2>, scalar_prefetch = 0 : i64, scratch_operands = 0 : i64, tpu.core_type = #tpu.core_type<tc>, window_params = [{transform_indices = @transform_0, window_bounds = array<i64: 1024, 128>}, {pipeline_mode = #tpu.pipeline_mode<synchronous>, transform_indices = @transform_1, window_bounds = array<i64: 128, 128>}, {pipeline_mode = #tpu.pipeline_mode<synchronous>, transform_indices = @transform_2, window_bounds = array<i64: 1, 128>}, {transform_indices = @transform_3, window_bounds = array<i64: 1024, 128>}]} {
    %c0 = arith.constant 0 : index
    %c0_0 = arith.constant 0 : index
    %0 = vector.load %arg1[%c0, %c0_0] : memref<1024x128xf32, #tpu.memory_space<vmem>>, vector<1024x128xf32>
    %c0_1 = arith.constant 0 : index
    %c0_2 = arith.constant 0 : index
    %1 = vector.load %arg2[%c0_1, %c0_2] : memref<128x128xf32, #tpu.memory_space<vmem>>, vector<128x128xf32>
    %cst = arith.constant dense<0.000000e+00> : vector<1024x128xf32>
    %2 = tpu.matmul %0, %1, %cst {dimension_numbers = #tpu.dot_dimension_numbers<[1], [0], [0], [1], [0, 0, 1, 1], [], []>} : vector<1024x128xf32>, vector<128x128xf32>, vector<1024x128xf32> -> vector<1024x128xf32>
    %c0_3 = arith.constant 0 : index
    %c0_4 = arith.constant 0 : index
    %3 = vector.load %arg3[%c0_3, %c0_4] : memref<1x128xf32, #tpu.memory_space<vmem>>, vector<1x128xf32>
    %4 = vector.broadcast %3 : vector<1x128xf32> to vector<1024x128xf32>
    %5 = arith.addf %2, %4 : vector<1024x128xf32>
    %c0_5 = arith.constant 0 : index
    %c0_6 = arith.constant 0 : index
    %6 = vector.load %arg4[%c0_5, %c0_6] : memref<1024x128xf32, #tpu.memory_space<vmem>>, vector<1024x128xf32>
    tpu.vector_store %arg4[%c0_5, %c0_6], %5 {strides = array<i32>} : memref<1024x128xf32, #tpu.memory_space<vmem>>, vector<1024x128xf32>,
    return
  }
  func.func @transform_0(%arg0: i32) -> (i32, i32) {
    %c0_i32 = arith.constant 0 : i32
    %c0_i32_0 = arith.constant 0 : i32
    return %arg0, %c0_i32 : i32, i32
  }
  func.func @transform_1(%arg0: i32) -> (i32, i32) {
    %c0_i32 = arith.constant 0 : i32
    %c0_i32_0 = arith.constant 0 : i32
    %c0_i32_1 = arith.constant 0 : i32
    return %c0_i32, %c0_i32_0 : i32, i32
  }
  func.func @transform_2(%arg0: i32) -> (i32, i32) {
    %c0_i32 = arith.constant 0 : i32
    %c0_i32_0 = arith.constant 0 : i32
    %c0_i32_1 = arith.constant 0 : i32
    return %c0_i32, %c0_i32_0 : i32, i32
  }
  func.func @transform_3(%arg0: i32) -> (i32, i32) {
    %c0_i32 = arith.constant 0 : i32
    %c0_i32_0 = arith.constant 0 : i32
    return %arg0, %c0_i32 : i32, i32
  }
}

</mosaic_0001>

<llo_original>
// kernel: tpu_custom_call.1
$region0: #{tpu_custom_call.1}
  #allocation0 [shape = 'u32[]', space=smem, size = 0x4, offset = 0x4, fixed_abs, tag = 'smem constant byte address 0x4 - core index']
  #allocation1 [shape = 'u32[144,128]{1,0:T(1,128)}', space=vmem, size = 0x12000, scoped, tag = 'internal scratch']
  %s0 = inlined_call_operand.hbm [shape: f32[1280,128], index: 0, kind: input, shape index: {}]
  %s1 = inlined_call_operand.hbm [shape: f32[128,128], index: 1, kind: input, shape index: {}]
  %s2 = inlined_call_operand.vmem [shape: f32[1,128], index: 2, kind: input, shape index: {}]
  %s3 = inlined_call_operand.hbm [shape: f32[1280,128], index: 3, kind: output, shape index: {}]
  %s4 = sld [smem:[#allocation0]]
  $region53: #{tpu_custom_call.1} parent=0
    _
  %s6 = ssub.s32 1, %s4
  %s7 = scalar_select 0, %s6, %s4
  $region1: #{tpu_custom_call.1} parent=0
    #allocation2 [shape = 'u8[1048576]{0}', space=vmem, size = 0x100000, scoped, tag = 'input window, operand 0']
    #allocation3 [shape = 's32[2]{0}', space=sflag, size = 0x8, scoped, tag = 'scoped memory for tpu_custom_call.1']
    #allocation4 [shape = 's32[2]{0}', space=sflag, size = 0x8, scoped, tag = 'scoped memory for tpu_custom_call.1']
    #allocation5 [shape = 'u8[65536]{0}', space=vmem, size = 0x10000, scoped, tag = 'input window, operand 1, single buffered']
    #allocation6 [shape = 's32[1]{0}', space=sflag, size = 0x4, scoped, tag = 'scoped memory for tpu_custom_call.1']
    #allocation7 [shape = 'u8[1048576]{0}', space=vmem, size = 0x100000, scoped, tag = 'output window, operand 0']
    %8 = vsyncpa [#allocation3], 0
    %s9 = scalar_lea.sflag [#allocation3], 1
    %10 = vsyncpa %s9, 0
    %11 = vsyncpa [#allocation6], 0
    %12 = vsyncpa [#allocation4], 0
    %s13 = scalar_lea.sflag [#allocation4], 1
    %14 = vsyncpa %s13, 0
    loop: start=0, step=1, limit=4
    $region2: #{tpu_custom_call.1} parent=1 // loop_pre_header
      _
    $region3: #{tpu_custom_call.1} parent=1 // loop_header
      %s16 = sphi 0, %s20
      %p17 = scmp.ge.s32.totalorder %s16, 4
      %s26 = sphi 0, %s28
      %s29 = sphi 0, %s26
      %s30 = sphi 0, %s29
      %s46 = sphi 0, %s30
      %s50 = sphi 0, %s50
      %s52 = sphi 0, %s50
      %s53 = sphi 0, %s52
      %s67 = sphi 0, %s53
      %s71 = sphi 0, %s71
      %s73 = sphi 0, %s71
      %s74 = sphi 0, %s73
      %s88 = sphi 0, %s74
      %s94 = sphi 0, %s96
      %s97 = sphi 0, %s94
      %s98 = sphi 0, %s97
      %s114 = sphi 0, %s98
    $region4: #{tpu_custom_call.1} parent=1 // loop_header_branch
      %19 = sbr.rel (%p17) target = $region8
    $region5: #{tpu_custom_call.1} parent=1 // loop_body
      %s21 = ssub.s32 %s16, 1
      %s22 = ssub.s32 %s16, 2
      %s23 = sadd.s32 %s16, 1
      %s24 = ssub.s32 %s16, %s23
      %p25 = scmp.eq.s32.totalorder %s24, 0
      %s27 = sadd.s32 %s26, 1
      %s28 = scalar_select %p25, %s26, %s27
      %p31 = pneg %p25
      %p32 = scmp.eq.s32.totalorder %s16, 1
      %p33 = por %p31, %p32
      %p34 = scmp.ne.s32.totalorder %s26, %s29
      %p35 = scmp.eq.s32.totalorder %s16, 0
      %p36 = por %p34, %p35
      %p37 = scmp.ne.s32.totalorder %s26, %s29
      %p38 = scmp.eq.s32.totalorder %s21, 1
      %p39 = por %p37, %p38
      %p40 = scmp.ne.s32.totalorder %s29, %s30
      %p41 = scmp.eq.s32.totalorder %s21, 0
      %p42 = por %p40, %p41
      %p43 = scmp.ne.s32.totalorder %s29, %s30
      %p44 = scmp.eq.s32.totalorder %s22, 1
      %p45 = por %p43, %p44
      %p47 = scmp.ne.s32.totalorder %s30, %s46
      %p48 = scmp.eq.s32.totalorder %s22, 0
      %p49 = por %p47, %p48
      %s51 = sadd.s32 %s50, 1
      %p54 = scmp.eq.s32.totalorder %s16, 1
      %p55 = scmp.ne.s32.totalorder %s50, %s52
      %p56 = scmp.eq.s32.totalorder %s16, 0
      %p57 = por %p55, %p56
      %p58 = scmp.ne.s32.totalorder %s50, %s52
      %p59 = scmp.eq.s32.totalorder %s21, 1
      %p60 = por %p58, %p59
      %p61 = scmp.ne.s32.totalorder %s52, %s53
      %p62 = scmp.eq.s32.totalorder %s21, 0
      %p63 = por %p61, %p62
      %p64 = scmp.ne.s32.totalorder %s52, %s53
      %p65 = scmp.eq.s32.totalorder %s22, 1
      %p66 = por %p64, %p65
      %p68 = scmp.ne.s32.totalorder %s53, %s67
      %p69 = scmp.eq.s32.totalorder %s22, 0
      %p70 = por %p68, %p69
      %s72 = sadd.s32 %s71, 1
      %p75 = scmp.eq.s32.totalorder %s16, 1
      %p76 = scmp.ne.s32.totalorder %s71, %s73
      %p77 = scmp.eq.s32.totalorder %s16, 0
      %p78 = por %p76, %p77
      %p79 = scmp.ne.s32.totalorder %s71, %s73
      %p80 = scmp.eq.s32.totalorder %s21, 1
      %p81 = por %p79, %p80
      %p82 = scmp.ne.s32.totalorder %s73, %s74
      %p83 = scmp.eq.s32.totalorder %s21, 0
      %p84 = por %p82, %p83
      %p85 = scmp.ne.s32.totalorder %s73, %s74
      %p86 = scmp.eq.s32.totalorder %s22, 1
      %p87 = por %p85, %p86
      %p89 = scmp.ne.s32.totalorder %s74, %s88
      %p90 = scmp.eq.s32.totalorder %s22, 0
      %p91 = por %p89, %p90
      %s92 = ssub.s32 %s16, %s23
      %p93 = scmp.eq.s32.totalorder %s92, 0
      %s95 = sadd.s32 %s94, 1
      %s96 = scalar_select %p93, %s94, %s95
      %p99 = pneg %p93
      %p100 = scmp.eq.s32.totalorder %s16, 1
      %p101 = por %p99, %p100
      %p102 = scmp.ne.s32.totalorder %s94, %s97
      %p103 = scmp.eq.s32.totalorder %s16, 0
      %p104 = por %p102, %p103
      %p105 = scmp.ne.s32.totalorder %s94, %s97
      %p106 = scmp.eq.s32.totalorder %s21, 1
      %p107 = por %p105, %p106
      %p108 = scmp.ne.s32.totalorder %s97, %s98
      %p109 = scmp.eq.s32.totalorder %s21, 0
      %p110 = por %p108, %p109
      %p111 = scmp.ne.s32.totalorder %s97, %s98
      %p112 = scmp.eq.s32.totalorder %s22, 1
      %p113 = por %p111, %p112
      %p115 = scmp.ne.s32.totalorder %s98, %s114
      %p116 = scmp.eq.s32.totalorder %s22, 0
      %p117 = por %p115, %p116
      %p118 = scmp.le.s32.totalorder 1, %s16
      %p119 = scmp.lt.s32.totalorder %s16, 3
      %p120 = pnand %p118, %p119
      %p121 = pneg %p120
      // Predicated region
      $region9: #{tpu_custom_call.1} parent=5 // pred_check
        _
      $region10: #{tpu_custom_call.1} parent=5 // pred_check_branch
        %123 = sbr.rel (%p120) target = $region12
      $region11: #{tpu_custom_call.1} parent=5 // pred_region
        %s124 = ssub.s32 %s16, 1
        // Predicated region
        $region13: #{tpu_custom_call.1} parent=11 // pred_check
          %p125 = pneg %p63
        $region14: #{tpu_custom_call.1} parent=11 // pred_check_branch
          %127 = sbr.rel (%p125) target = $region16
        $region15: #{tpu_custom_call.1} parent=11 // pred_region
          %s129 = ssub.s32 2048, 2048
          %130 = vsyncadd [#allocation6], %s129
          %s131 = sshll.u32 [#allocation5], 4
          %s132 = int_to_ptr.vmem [resolvable:$true] %s131
          %137 = dma.hbm_to_vmem [thread:$0]  %s1, 2048, %s132, [#allocation6], 128, 128, 8
        $region16: #{tpu_custom_call.1} parent=11 // pred_fallthru
          _
        // Predicated region
        $region17: #{tpu_custom_call.1} parent=11 // pred_check
          %p138 = pneg %p84
        $region18: #{tpu_custom_call.1} parent=11 // pred_check_branch
          %140 = sbr.rel (%p138) target = $region20
        $region19: #{tpu_custom_call.1} parent=11 // pred_region
          _
        $region20: #{tpu_custom_call.1} parent=11 // pred_fallthru
          _
      $region12: #{tpu_custom_call.1} parent=5 // pred_fallthru
        _
      %p141 = scmp.lt.s32.totalorder %s16, 2
      // Predicated region
      $region21: #{tpu_custom_call.1} parent=5 // pred_check
        %p142 = pneg %p141
      $region22: #{tpu_custom_call.1} parent=5 // pred_check_branch
        %144 = sbr.rel (%p142) target = $region24
      $region23: #{tpu_custom_call.1} parent=5 // pred_region
        // Predicated region
        $region25: #{tpu_custom_call.1} parent=23 // pred_check
          %p145 = pneg %p36
        $region26: #{tpu_custom_call.1} parent=23 // pred_check_branch
          %147 = sbr.rel (%p145) target = $region28
        $region27: #{tpu_custom_call.1} parent=23 // pred_region
          %s148 = sand.u32 %s26, 1
          %s149 = scalar_lea.sflag [#allocation3], %s148
          %s150 = sand.u32 %s26, 1
          %s151 = smul.addr %s150, 1024
          %s152 = scalar_lea.vmem [#allocation2], %s151
          %s153 = smul.u32 128, %s16
          %s154 = ssub.s32 160, %s153
          %p155 = scmp.lt.s32.totalorder %s154, 128
          %s156 = scalar_select %p155, %s154, 128
          %s157 = smul.u32 128, %s156
          %s159 = ssub.s32 16384, %s157
          %160 = vsyncadd %s149, %s159
          %p161 = scmp.ne.s32.totalorder 0, %s157
          %s162 = smul.addr %s153, 128
          %s163 = scalar_lea.hbm %s0, %s162
          %s164 = smul.u32 8, %s156
          %s165 = sshll.u32 %s152, 4
          %s166 = int_to_ptr.vmem [resolvable:$true] %s165
          %s167 = sshll.u32 %s164, 4
          %171 = dma.hbm_to_vmem [thread:$0]  (%p161), %s163, %s167, %s166, %s149, 128, 128, 8
        $region28: #{tpu_custom_call.1} parent=23 // pred_fallthru
          _
      $region24: #{tpu_custom_call.1} parent=5 // pred_fallthru
        _
      %p172 = scmp.le.s32.totalorder 1, %s16
      %p173 = scmp.lt.s32.totalorder %s16, 3
      %p174 = pnand %p172, %p173
      %p175 = pneg %p174
      // Predicated region
      $region29: #{tpu_custom_call.1} parent=5 // pred_check
        _
      $region30: #{tpu_custom_call.1} parent=5 // pred_check_branch
        %177 = sbr.rel (%p174) target = $region32
      $region31: #{tpu_custom_call.1} parent=5 // pred_region
        %s178 = ssub.s32 %s16, 1
        %s179 = sand.u32 %s29, 1
        %s180 = scalar_lea.sflag [#allocation3], %s179
        %s181 = sand.u32 %s29, 1
        %s182 = smul.addr %s181, 1024
        %s183 = scalar_lea.vmem [#allocation2], %s182
        // Predicated region
        $region33: #{tpu_custom_call.1} parent=31 // pred_check
          %p184 = pneg %p42
        $region34: #{tpu_custom_call.1} parent=31 // pred_check_branch
          %186 = sbr.rel (%p184) target = $region36
        $region35: #{tpu_custom_call.1} parent=31 // pred_region
          %187 = dma.done %s180, 16384
        $region36: #{tpu_custom_call.1} parent=31 // pred_fallthru
          _
        // Predicated region
        $region37: #{tpu_custom_call.1} parent=31 // pred_check
          %p188 = pneg %p63
        $region38: #{tpu_custom_call.1} parent=31 // pred_check_branch
          %190 = sbr.rel (%p188) target = $region40
        $region39: #{tpu_custom_call.1} parent=31 // pred_region
          %191 = dma.done [#allocation6], 2048
        $region40: #{tpu_custom_call.1} parent=31 // pred_fallthru
          _
        %s192 = sand.u32 %s29, 1
        %s193 = scalar_lea.sflag [#allocation3], %s192
        %s194 = sand.u32 %s29, 1
        %s195 = smul.addr %s194, 1024
        %s196 = scalar_lea.vmem [#allocation2], %s195
        %p197 = pneg %p42
        %p198 = pneg %p39
        %p199 = pneg %p63
        %p200 = pneg %p60
        %p201 = pneg %p84
        %p202 = pneg %p81
        %p203 = pneg %p110
        %p204 = pneg %p107
        %s205 = sand.u32 %s97, 1
        %s206 = scalar_lea.sflag [#allocation4], %s205
        %s207 = sand.u32 %s97, 1
        %s208 = smul.addr %s207, 1024
        %s209 = scalar_lea.vmem [#allocation7], %s208
        %s210 = smul.u32 128, %s21
        %s211 = ssub.s32 160, %s210
        %p212 = scmp.lt.s32.totalorder %s211, 128
        %s213 = scalar_select %p212, %s211, 128
        %s214 = smul.u32 128, %s213
        %s215 = smul.u32 128, %s21
        %s216 = ssub.s32 160, %s215
        %p217 = scmp.lt.s32.totalorder %s216, 128
        %s218 = scalar_select %p217, %s216, 128
        %s219 = smul.u32 128, %s218
        %v220 = vld [vmem:[%s183] sm:$0xff]
        %v221 = vld [vmem:[%s183 + $0x8] sm:$0xff]
        %v222 = vld [vmem:[%s183 + $0x10] sm:$0xff]
        %v223 = vld [vmem:[%s183 + $0x18] sm:$0xff]
        %v224 = vld [vmem:[%s183 + $0x20] sm:$0xff]
        %v225 = vld [vmem:[%s183 + $0x28] sm:$0xff]
        %v226 = vld [vmem:[%s183 + $0x30] sm:$0xff]
        %v227 = vld [vmem:[%s183 + $0x38] sm:$0xff]
        %v228 = vld [vmem:[%s183 + $0x40] sm:$0xff]
        %v229 = vld [vmem:[%s183 + $0x48] sm:$0xff]
        %v230 = vld [vmem:[%s183 + $0x50] sm:$0xff]
        %v231 = vld [vmem:[%s183 + $0x58] sm:$0xff]
        %v232 = vld [vmem:[%s183 + $0x60] sm:$0xff]
        %v233 = vld [vmem:[%s183 + $0x68] sm:$0xff]
        %v234 = vld [vmem:[%s183 + $0x70] sm:$0xff]
        %v235 = vld [vmem:[%s183 + $0x78] sm:$0xff]
        %v236 = vld [vmem:[%s183 + $0x80] sm:$0xff]
        %v237 = vld [vmem:[%s183 + $0x88] sm:$0xff]
        %v238 = vld [vmem:[%s183 + $0x90] sm:$0xff]
        %v239 = vld [vmem:[%s183 + $0x98] sm:$0xff]
        %v240 = vld [vmem:[%s183 + $0xa0] sm:$0xff]
        %v241 = vld [vmem:[%s183 + $0xa8] sm:$0xff]
        %v242 = vld [vmem:[%s183 + $0xb0] sm:$0xff]
        %v243 = vld [vmem:[%s183 + $0xb8] sm:$0xff]
        %v244 = vld [vmem:[%s183 + $0xc0] sm:$0xff]
        %v245 = vld [vmem:[%s183 + $0xc8] sm:$0xff]
        %v246 = vld [vmem:[%s183 + $0xd0] sm:$0xff]
        %v247 = vld [vmem:[%s183 + $0xd8] sm:$0xff]
        %v248 = vld [vmem:[%s183 + $0xe0] sm:$0xff]
        %v249 = vld [vmem:[%s183 + $0xe8] sm:$0xff]
        %v250 = vld [vmem:[%s183 + $0xf0] sm:$0xff]
        %v251 = vld [vmem:[%s183 + $0xf8] sm:$0xff]
        %v252 = vld [vmem:[%s183 + $0x100] sm:$0xff]
        %v253 = vld [vmem:[%s183 + $0x108] sm:$0xff]
        %v254 = vld [vmem:[%s183 + $0x110] sm:$0xff]
        %v255 = vld [vmem:[%s183 + $0x118] sm:$0xff]
        %v256 = vld [vmem:[%s183 + $0x120] sm:$0xff]
        %v257 = vld [vmem:[%s183 + $0x128] sm:$0xff]
        %v258 = vld [vmem:[%s183 + $0x130] sm:$0xff]
        %v259 = vld [vmem:[%s183 + $0x138] sm:$0xff]
        %v260 = vld [vmem:[%s183 + $0x140] sm:$0xff]
        %v261 = vld [vmem:[%s183 + $0x148] sm:$0xff]
        %v262 = vld [vmem:[%s183 + $0x150] sm:$0xff]
        %v263 = vld [vmem:[%s183 + $0x158] sm:$0xff]
        %v264 = vld [vmem:[%s183 + $0x160] sm:$0xff]
        %v265 = vld [vmem:[%s183 + $0x168] sm:$0xff]
        %v266 = vld [vmem:[%s183 + $0x170] sm:$0xff]
        %v267 = vld [vmem:[%s183 + $0x178] sm:$0xff]
        %v268 = vld [vmem:[%s183 + $0x180] sm:$0xff]
        %v269 = vld [vmem:[%s183 + $0x188] sm:$0xff]
        %v270 = vld [vmem:[%s183 + $0x190] sm:$0xff]
        %v271 = vld [vmem:[%s183 + $0x198] sm:$0xff]
        %v272 = vld [vmem:[%s183 + $0x1a0] sm:$0xff]
        %v273 = vld [vmem:[%s183 + $0x1a8] sm:$0xff]
        %v274 = vld [vmem:[%s183 + $0x1b0] sm:$0xff]
        %v275 = vld [vmem:[%s183 + $0x1b8] sm:$0xff]
        %v276 = vld [vmem:[%s183 + $0x1c0] sm:$0xff]
        %v277 = vld [vmem:[%s183 + $0x1c8] sm:$0xff]
        %v278 = vld [vmem:[%s183 + $0x1d0] sm:$0xff]
        %v279 = vld [vmem:[%s183 + $0x1d8] sm:$0xff]
        %v280 = vld [vmem:[%s183 + $0x1e0] sm:$0xff]
        %v281 = vld [vmem:[%s183 + $0x1e8] sm:$0xff]
        %v282 = vld [vmem:[%s183 + $0x1f0] sm:$0xff]
        %v283 = vld [vmem:[%s183 + $0x1f8] sm:$0xff]
        %v284 = vld [vmem:[%s183 + $0x200] sm:$0xff]
        %v285 = vld [vmem:[%s183 + $0x208] sm:$0xff]
        %v286 = vld [vmem:[%s183 + $0x210] sm:$0xff]
        %v287 = vld [vmem:[%s183 + $0x218] sm:$0xff]
        %v288 = vld [vmem:[%s183 + $0x220] sm:$0xff]
        %v289 = vld [vmem:[%s183 + $0x228] sm:$0xff]
        %v290 = vld [vmem:[%s183 + $0x230] sm:$0xff]
        %v291 = vld [vmem:[%s183 + $0x238] sm:$0xff]
        %v292 = vld [vmem:[%s183 + $0x240] sm:$0xff]
        %v293 = vld [vmem:[%s183 + $0x248] sm:$0xff]
        %v294 = vld [vmem:[%s183 + $0x250] sm:$0xff]
        %v295 = vld [vmem:[%s183 + $0x258] sm:$0xff]
        %v296 = vld [vmem:[%s183 + $0x260] sm:$0xff]
        %v297 = vld [vmem:[%s183 + $0x268] sm:$0xff]
        %v298 = vld [vmem:[%s183 + $0x270] sm:$0xff]
        %v299 = vld [vmem:[%s183 + $0x278] sm:$0xff]
        %v300 = vld [vmem:[%s183 + $0x280] sm:$0xff]
        %v301 = vld [vmem:[%s183 + $0x288] sm:$0xff]
        %v302 = vld [vmem:[%s183 + $0x290] sm:$0xff]
        %v303 = vld [vmem:[%s183 + $0x298] sm:$0xff]
        %v304 = vld [vmem:[%s183 + $0x2a0] sm:$0xff]
        %v305 = vld [vmem:[%s183 + $0x2a8] sm:$0xff]
        %v306 = vld [vmem:[%s183 + $0x2b0] sm:$0xff]
        %v307 = vld [vmem:[%s183 + $0x2b8] sm:$0xff]
        %v308 = vld [vmem:[%s183 + $0x2c0] sm:$0xff]
        %v309 = vld [vmem:[%s183 + $0x2c8] sm:$0xff]
        %v310 = vld [vmem:[%s183 + $0x2d0] sm:$0xff]
        %v311 = vld [vmem:[%s183 + $0x2d8] sm:$0xff]
        %v312 = vld [vmem:[%s183 + $0x2e0] sm:$0xff]
        %v313 = vld [vmem:[%s183 + $0x2e8] sm:$0xff]
        %v314 = vld [vmem:[%s183 + $0x2f0] sm:$0xff]
        %v315 = vld [vmem:[%s183 + $0x2f8] sm:$0xff]
        %v316 = vld [vmem:[%s183 + $0x300] sm:$0xff]
        %v317 = vld [vmem:[%s183 + $0x308] sm:$0xff]
        %v318 = vld [vmem:[%s183 + $0x310] sm:$0xff]
        %v319 = vld [vmem:[%s183 + $0x318] sm:$0xff]
        %v320 = vld [vmem:[%s183 + $0x320] sm:$0xff]
        %v321 = vld [vmem:[%s183 + $0x328] sm:$0xff]
        %v322 = vld [vmem:[%s183 + $0x330] sm:$0xff]
        %v323 = vld [vmem:[%s183 + $0x338] sm:$0xff]
        %v324 = vld [vmem:[%s183 + $0x340] sm:$0xff]
        %v325 = vld [vmem:[%s183 + $0x348] sm:$0xff]
        %v326 = vld [vmem:[%s183 + $0x350] sm:$0xff]
        %v327 = vld [vmem:[%s183 + $0x358] sm:$0xff]
        %v328 = vld [vmem:[%s183 + $0x360] sm:$0xff]
        %v329 = vld [vmem:[%s183 + $0x368] sm:$0xff]
        %v330 = vld [vmem:[%s183 + $0x370] sm:$0xff]
        %v331 = vld [vmem:[%s183 + $0x378] sm:$0xff]
        %v332 = vld [vmem:[%s183 + $0x380] sm:$0xff]
        %v333 = vld [vmem:[%s183 + $0x388] sm:$0xff]
        %v334 = vld [vmem:[%s183 + $0x390] sm:$0xff]
        %v335 = vld [vmem:[%s183 + $0x398] sm:$0xff]
        %v336 = vld [vmem:[%s183 + $0x3a0] sm:$0xff]
        %v337 = vld [vmem:[%s183 + $0x3a8] sm:$0xff]
        %v338 = vld [vmem:[%s183 + $0x3b0] sm:$0xff]
        %v339 = vld [vmem:[%s183 + $0x3b8] sm:$0xff]
        %v340 = vld [vmem:[%s183 + $0x3c0] sm:$0xff]
        %v341 = vld [vmem:[%s183 + $0x3c8] sm:$0xff]
        %v342 = vld [vmem:[%s183 + $0x3d0] sm:$0xff]
        %v343 = vld [vmem:[%s183 + $0x3d8] sm:$0xff]
        %v344 = vld [vmem:[%s183 + $0x3e0] sm:$0xff]
        %v345 = vld [vmem:[%s183 + $0x3e8] sm:$0xff]
        %v346 = vld [vmem:[%s183 + $0x3f0] sm:$0xff]
        %v347 = vld [vmem:[%s183 + $0x3f8] sm:$0xff]
        %v348 = vld [vmem:[#allocation5] sm:$0xff]
        %v349 = vld [vmem:[#allocation5 + $0x8] sm:$0xff]
        %v350 = vld [vmem:[#allocation5 + $0x10] sm:$0xff]
        %v351 = vld [vmem:[#allocation5 + $0x18] sm:$0xff]
        %v352 = vld [vmem:[#allocation5 + $0x20] sm:$0xff]
        %v353 = vld [vmem:[#allocation5 + $0x28] sm:$0xff]
        %v354 = vld [vmem:[#allocation5 + $0x30] sm:$0xff]
        %v355 = vld [vmem:[#allocation5 + $0x38] sm:$0xff]
        %v356 = vld [vmem:[#allocation5 + $0x40] sm:$0xff]
        %v357 = vld [vmem:[#allocation5 + $0x48] sm:$0xff]
        %v358 = vld [vmem:[#allocation5 + $0x50] sm:$0xff]
        %v359 = vld [vmem:[#allocation5 + $0x58] sm:$0xff]
        %v360 = vld [vmem:[#allocation5 + $0x60] sm:$0xff]
        %v361 = vld [vmem:[#allocation5 + $0x68] sm:$0xff]
        %v362 = vld [vmem:[#allocation5 + $0x70] sm:$0xff]
        %v363 = vld [vmem:[#allocation5 + $0x78] sm:$0xff]
        %v364 = vld [vmem:[%s2] sm:$0x1]
        %v366 = vlaneseq
        %v367 = vshrl.u32 %v366, 7
        %v368 = vsub.s32 0, %v367
        %v369 = vrot.slane %v364, %v368
        %371 = vmatprep.subr.mxu0 0.0
        %372 = vmatpush1.msra.mxu0 %v348
        %373 = vmatprep.subr.mxu0 0.0
        %374 = vmatpush1.msra.mxu0 %v349
        %375 = vmatprep.subr.mxu0 0.0
        %376 = vmatpush1.msra.mxu0 %v350
        %377 = vmatprep.subr.mxu0 0.0
        %378 = vmatpush1.msra.mxu0 %v351
        %379 = vmatprep.subr.mxu0 0.0
        %380 = vmatpush1.msra.mxu0 %v352
        %381 = vmatprep.subr.mxu0 0.0
        %382 = vmatpush1.msra.mxu0 %v353
        %383 = vmatprep.subr.mxu0 0.0
        %384 = vmatpush1.msra.mxu0 %v354
        %385 = vmatprep.subr.mxu0 0.0
        %386 = vmatpush1.msra.mxu0 %v355
        %387 = vmatprep.subr.mxu0 0.0
        %388 = vmatpush1.msra.mxu0 %v356
        %389 = vmatprep.subr.mxu0 0.0
        %390 = vmatpush1.msra.mxu0 %v357
        %391 = vmatprep.subr.mxu0 0.0
        %392 = vmatpush1.msra.mxu0 %v358
        %393 = vmatprep.subr.mxu0 0.0
        %394 = vmatpush1.msra.mxu0 %v359
        %395 = vmatprep.subr.mxu0 0.0
        %396 = vmatpush1.msra.mxu0 %v360
        %397 = vmatprep.subr.mxu0 0.0
        %398 = vmatpush1.msra.mxu0 %v361
        %399 = vmatprep.subr.mxu0 0.0
        %400 = vmatpush1.msra.mxu0 %v362
        %401 = vmatprep.subr.mxu0 0.0
        %402 = vmatpush1.msra.mxu0 %v363
        %403 = vmatprep.subr.mxu0 0.0
        %404 = vmatpush1.msra.mxu0 0.0
        %405 = vmatprep.subr.mxu0 0.0
        %406 = vmatpush1.msra.mxu0 0.0
        %407 = vmatprep.subr.mxu0 0.0
        %408 = vmatpush1.msra.mxu0 0.0
        %409 = vmatprep.subr.mxu0 0.0
        %410 = vmatpush1.msra.mxu0 0.0
        %411 = vmatprep.subr.mxu0 0.0
        %412 = vmatpush1.msra.mxu0 0.0
        %413 = vmatprep.subr.mxu0 0.0
        %414 = vmatpush1.msra.mxu0 0.0
        %415 = vmatprep.subr.mxu0 0.0
        %416 = vmatpush1.msra.mxu0 0.0
        %417 = vmatprep.subr.mxu0 0.0
        %418 = vmatpush1.msra.mxu0 0.0
        %419 = vmatprep.subr.mxu0 0.0
        %420 = vmatpush1.msra.mxu0 0.0
        %421 = vmatprep.subr.mxu0 0.0
        %422 = vmatpush1.msra.mxu0 0.0
        %423 = vmatprep.subr.mxu0 0.0
        %424 = vmatpush1.msra.mxu0 0.0
        %425 = vmatprep.subr.mxu0 0.0
        %426 = vmatpush1.msra.mxu0 0.0
        %427 = vmatprep.subr.mxu0 0.0
        %428 = vmatpush1.msra.mxu0 0.0
        %429 = vmatprep.subr.mxu0 0.0
        %430 = vmatpush1.msra.mxu0 0.0
        %431 = vmatprep.subr.mxu0 0.0
        %432 = vmatpush1.msra.mxu0 0.0
        %433 = vmatprep.subr.mxu0 0.0
        %434 = vmatpush1.msra.mxu0 0.0
        %435 = vmatprep.mubr.f32.mxu0 0.0
        %436 = vmatmul.mubr.f32.gmra.mrb[0].mxu0 %v220
        %v437 = vpop.f32.mrb[0].mxu0
        %v438 = vadd.f32 %v369, %v437
        %v439 = vpop.f32.mrb[0].mxu0
        %440 = vmatprep.mubr.f32.mxu0 0.0
        %441 = vmatmul.mubr.f32.gmra.mrb[0].mxu0 %v221
        %v442 = vpop.f32.mrb[0].mxu0
        %v443 = vadd.f32 %v369, %v442
        %v444 = vpop.f32.mrb[0].mxu0
        %445 = vmatprep.mubr.f32.mxu0 0.0
        %446 = vmatmul.mubr.f32.gmra.mrb[0].mxu0 %v222
        %v447 = vpop.f32.mrb[0].mxu0
        %v448 = vadd.f32 %v369, %v447
        %v449 = vpop.f32.mrb[0].mxu0
        %450 = vmatprep.mubr.f32.mxu0 0.0
        %451 = vmatmul.mubr.f32.gmra.mrb[0].mxu0 %v223
        %v452 = vpop.f32.mrb[0].mxu0
        %v453 = vadd.f32 %v369, %v452
        %v454 = vpop.f32.mrb[0].mxu0
        %455 = vmatprep.mubr.f32.mxu0 0.0
        %456 = vmatmul.mubr.f32.gmra.mrb[0].mxu0 %v224
        %v457 = vpop.f32.mrb[0].mxu0
        %v458 = vadd.f32 %v369, %v457
        %v459 = vpop.f32.mrb[0].mxu0
        %460 = vmatprep.mubr.f32.mxu0 0.0
        %461 = vmatmul.mubr.f32.gmra.mrb[0].mxu0 %v225
        %v462 = vpop.f32.mrb[0].mxu0
        %v463 = vadd.f32 %v369, %v462
        %v464 = vpop.f32.mrb[0].mxu0
        %465 = vmatprep.mubr.f32.mxu0 0.0
        %466 = vmatmul.mubr.f32.gmra.mrb[0].mxu0 %v226
        %v467 = vpop.f32.mrb[0].mxu0
        %v468 = vadd.f32 %v369, %v467
        %v469 = vpop.f32.mrb[0].mxu0
        %470 = vmatprep.mubr.f32.mxu0 0.0
        %471 = vmatmul.mubr.f32.gmra.mrb[0].mxu0 %v227
        %v472 = vpop.f32.mrb[0].mxu0
        %v473 = vadd.f32 %v369, %v472
        %v474 = vpop.f32.mrb[0].mxu0
        %475 = vmatprep.mubr.f32.mxu0 0.0
        %476 = vmatmul.mubr.f32.gmra.mrb[0].mxu0 %v228
        %v477 = vpop.f32.mrb[0].mxu0
        %v478 = vadd.f32 %v369, %v477
        %v479 = vpop.f32.mrb[0].mxu0
        %480 = vmatprep.mubr.f32.mxu0 0.0
        %481 = vmatmul.mubr.f32.gmra.mrb[0].mxu0 %v229
        %v482 = vpop.f32.mrb[0].mxu0
        %v483 = vadd.f32 %v369, %v482
        %v484 = vpop.f32.mrb[0].mxu0
        %485 = vmatprep.mubr.f32.mxu0 0.0
        %486 = vmatmul.mubr.f32.gmra.mrb[0].mxu0 %v230
        %v487 = vpop.f32.mrb[0].mxu0
        %v488 = vadd.f32 %v369, %v487
        %v489 = vpop.f32.mrb[0].mxu0
        %490 = vmatprep.mubr.f32.mxu0 0.0
        %491 = vmatmul.mubr.f32.gmra.mrb[0].mxu0 %v231
        %v492 = vpop.f32.mrb[0].mxu0
        %v493 = vadd.f32 %v369, %v492
        %v494 = vpop.f32.mrb[0].mxu0
        %495 = vmatprep.mubr.f32.mxu0 0.0
        %496 = vmatmul.mubr.f32.gmra.mrb[0].mxu0 %v232
        %v497 = vpop.f32.mrb[0].mxu0
        %v498 = vadd.f32 %v369, %v497
        %v499 = vpop.f32.mrb[0].mxu0
        %500 = vmatprep.mubr.f32.mxu0 0.0
        %501 = vmatmul.mubr.f32.gmra.mrb[0].mxu0 %v233
        %v502 = vpop.f32.mrb[0].mxu0
        %v503 = vadd.f32 %v369, %v502
        %v504 = vpop.f32.mrb[0].mxu0
        %505 = vmatprep.mubr.f32.mxu0 0.0
        %506 = vmatmul.mubr.f32.gmra.mrb[0].mxu0 %v234
        %v507 = vpop.f32.mrb[0].mxu0
        %v508 = vadd.f32 %v369, %v507
        %v509 = vpop.f32.mrb[0].mxu0
        %510 = vmatprep.mubr.f32.mxu0 0.0
        %511 = vmatmul.mubr.f32.gmra.mrb[0].mxu0 %v235
        %v512 = vpop.f32.mrb[0].mxu0
        %v513 = vadd.f32 %v369, %v512
        %v514 = vpop.f32.mrb[0].mxu0
        %515 = vmatprep.mubr.f32.mxu0 0.0
        %516 = vmatmul.mubr.f32.gmra.mrb[0].mxu0 %v236
        %v517 = vpop.f32.mrb[0].mxu0
        %v518 = vadd.f32 %v369, %v517
        %v519 = vpop.f32.mrb[0].mxu0
        %520 = vmatprep.mubr.f32.mxu0 0.0
        %521 = vmatmul.mubr.f32.gmra.mrb[0].mxu0 %v237
        %v522 = vpop.f32.mrb[0].mxu0
        %v523 = vadd.f32 %v369, %v522
        %v524 = vpop.f32.mrb[0].mxu0
        %525 = vmatprep.mubr.f32.mxu0 0.0
        %526 = vmatmul.mubr.f32.gmra.mrb[0].mxu0 %v238
        %v527 = vpop.f32.mrb[0].mxu0
        %v528 = vadd.f32 %v369, %v527
        %v529 = vpop.f32.mrb[0].mxu0
        %530 = vmatprep.mubr.f32.mxu0 0.0
        %531 = vmatmul.mubr.f32.gmra.mrb[0].mxu0 %v239
        %v532 = vpop.f32.mrb[0].mxu0
        %v533 = vadd.f32 %v369, %v532
        %v534 = vpop.f32.mrb[0].mxu0
        %535 = vmatprep.mubr.f32.mxu0 0.0
        %536 = vmatmul.mubr.f32.gmra.mrb[0].mxu0 %v240
        %v537 = vpop.f32.mrb[0].mxu0
        %v538 = vadd.f32 %v369, %v537
        %v539 = vpop.f32.mrb[0].mxu0
        %540 = vmatprep.mubr.f32.mxu0 0.0
        %541 = vmatmul.mubr.f32.gmra.mrb[0].mxu0 %v241
        %v542 = vpop.f32.mrb[0].mxu0
        %v543 = vadd.f32 %v369, %v542
        %v544 = vpop.f32.mrb[0].mxu0
        %545 = vmatprep.mubr.f32.mxu0 0.0
        %546 = vmatmul.mubr.f32.gmra.mrb[0].mxu0 %v242
        %v547 = vpop.f32.mrb[0].mxu0
        %v548 = vadd.f32 %v369, %v547
        %v549 = vpop.f32.mrb[0].mxu0
        %550 = vmatprep.mubr.f32.mxu0 0.0
        %551 = vmatmul.mubr.f32.gmra.mrb[0].mxu0 %v243
        %v552 = vpop.f32.mrb[0].mxu0
        %v553 = vadd.f32 %v369, %v552
        %v554 = vpop.f32.mrb[0].mxu0
        %555 = vmatprep.mubr.f32.mxu0 0.0
        %556 = vmatmul.mubr.f32.gmra.mrb[0].mxu0 %v244
        %v557 = vpop.f32.mrb[0].mxu0
        %v558 = vadd.f32 %v369, %v557
        %v559 = vpop.f32.mrb[0].mxu0
        %560 = vmatprep.mubr.f32.mxu0 0.0
        %561 = vmatmul.mubr.f32.gmra.mrb[0].mxu0 %v245
        %v562 = vpop.f32.mrb[0].mxu0
        %v563 = vadd.f32 %v369, %v562
        %v564 = vpop.f32.mrb[0].mxu0
        %565 = vmatprep.mubr.f32.mxu0 0.0
        %566 = vmatmul.mubr.f32.gmra.mrb[0].mxu0 %v246
        %v567 = vpop.f32.mrb[0].mxu0
        %v568 = vadd.f32 %v369, %v567
        %v569 = vpop.f32.mrb[0].mxu0
        %570 = vmatprep.mubr.f32.mxu0 0.0
        %571 = vmatmul.mubr.f32.gmra.mrb[0].mxu0 %v247
        %v572 = vpop.f32.mrb[0].mxu0
        %v573 = vadd.f32 %v369, %v572
        %v574 = vpop.f32.mrb[0].mxu0
        %575 = vmatprep.mubr.f32.mxu0 0.0
        %576 = vmatmul.mubr.f32.gmra.mrb[0].mxu0 %v248
        %v577 = vpop.f32.mrb[0].mxu0
        %v578 = vadd.f32 %v369, %v577
        %v579 = vpop.f32.mrb[0].mxu0
        %580 = vmatprep.mubr.f32.mxu0 0.0
        %581 = vmatmul.mubr.f32.gmra.mrb[0].mxu0 %v249
        %v582 = vpop.f32.mrb[0].mxu0
        %v583 = vadd.f32 %v369, %v582
        %v584 = vpop.f32.mrb[0].mxu0
        %585 = vmatprep.mubr.f32.mxu0 0.0
        %586 = vmatmul.mubr.f32.gmra.mrb[0].mxu0 %v250
        %v587 = vpop.f32.mrb[0].mxu0
        %v588 = vadd.f32 %v369, %v587
        %v589 = vpop.f32.mrb[0].mxu0
        %590 = vmatprep.mubr.f32.mxu0 0.0
        %591 = vmatmul.mubr.f32.gmra.mrb[0].mxu0 %v251
        %v592 = vpop.f32.mrb[0].mxu0
        %v593 = vadd.f32 %v369, %v592
        %v594 = vpop.f32.mrb[0].mxu0
        %595 = vmatprep.mubr.f32.mxu0 0.0
        %596 = vmatmul.mubr.f32.gmra.mrb[0].mxu0 %v252
        %v597 = vpop.f32.mrb[0].mxu0
        %v598 = vadd.f32 %v369, %v597
        %v599 = vpop.f32.mrb[0].mxu0
        %600 = vmatprep.mubr.f32.mxu0 0.0
        %601 = vmatmul.mubr.f32.gmra.mrb[0].mxu0 %v253
        %v602 = vpop.f32.mrb[0].mxu0
        %v603 = vadd.f32 %v369, %v602
        %v604 = vpop.f32.mrb[0].mxu0
        %605 = vmatprep.mubr.f32.mxu0 0.0
        %606 = vmatmul.mubr.f32.gmra.mrb[0].mxu0 %v254
        %v607 = vpop.f32.mrb[0].mxu0
        %v608 = vadd.f32 %v369, %v607
        %v609 = vpop.f32.mrb[0].mxu0
        %610 = vmatprep.mubr.f32.mxu0 0.0
        %611 = vmatmul.mubr.f32.gmra.mrb[0].mxu0 %v255
        %v612 = vpop.f32.mrb[0].mxu0
        %v613 = vadd.f32 %v369, %v612
        %v614 = vpop.f32.mrb[0].mxu0
        %615 = vmatprep.mubr.f32.mxu0 0.0
        %616 = vmatmul.mubr.f32.gmra.mrb[0].mxu0 %v256
        %v617 = vpop.f32.mrb[0].mxu0
        %v618 = vadd.f32 %v369, %v617
        %v619 = vpop.f32.mrb[0].mxu0
        %620 = vmatprep.mubr.f32.mxu0 0.0
        %621 = vmatmul.mubr.f32.gmra.mrb[0].mxu0 %v257
        %v622 = vpop.f32.mrb[0].mxu0
        %v623 = vadd.f32 %v369, %v622
        %v624 = vpop.f32.mrb[0].mxu0
        %625 = vmatprep.mubr.f32.mxu0 0.0
        %626 = vmatmul.mubr.f32.gmra.mrb[0].mxu0 %v258
        %v627 = vpop.f32.mrb[0].mxu0
        %v628 = vadd.f32 %v369, %v627
        %v629 = vpop.f32.mrb[0].mxu0
        %630 = vmatprep.mubr.f32.mxu0 0.0
        %631 = vmatmul.mubr.f32.gmra.mrb[0].mxu0 %v259
        %v632 = vpop.f32.mrb[0].mxu0
        %v633 = vadd.f32 %v369, %v632
        %v634 = vpop.f32.mrb[0].mxu0
        %635 = vmatprep.mubr.f32.mxu0 0.0
        %636 = vmatmul.mubr.f32.gmra.mrb[0].mxu0 %v260
        %v637 = vpop.f32.mrb[0].mxu0
        %v638 = vadd.f32 %v369, %v637
        %v639 = vpop.f32.mrb[0].mxu0
        %640 = vmatprep.mubr.f32.mxu0 0.0
        %641 = vmatmul.mubr.f32.gmra.mrb[0].mxu0 %v261
        %v642 = vpop.f32.mrb[0].mxu0
        %v643 = vadd.f32 %v369, %v642
        %v644 = vpop.f32.mrb[0].mxu0
        %645 = vmatprep.mubr.f32.mxu0 0.0
        %646 = vmatmul.mubr.f32.gmra.mrb[0].mxu0 %v262
        %v647 = vpop.f32.mrb[0].mxu0
        %v648 = vadd.f32 %v369, %v647
        %v649 = vpop.f32.mrb[0].mxu0
        %650 = vmatprep.mubr.f32.mxu0 0.0
        %651 = vmatmul.mubr.f32.gmra.mrb[0].mxu0 %v263
        %v652 = vpop.f32.mrb[0].mxu0
        %v653 = vadd.f32 %v369, %v652
        %v654 = vpop.f32.mrb[0].mxu0
        %655 = vmatprep.mubr.f32.mxu0 0.0
        %656 = vmatmul.mubr.f32.gmra.mrb[0].mxu0 %v264
        %v657 = vpop.f32.mrb[0].mxu0
        %v658 = vadd.f32 %v369, %v657
        %v659 = vpop.f32.mrb[0].mxu0
        %660 = vmatprep.mubr.f32.mxu0 0.0
        %661 = vmatmul.mubr.f32.gmra.mrb[0].mxu0 %v265
        %v662 = vpop.f32.mrb[0].mxu0
        %v663 = vadd.f32 %v369, %v662
        %v664 = vpop.f32.mrb[0].mxu0
        %665 = vmatprep.mubr.f32.mxu0 0.0
        %666 = vmatmul.mubr.f32.gmra.mrb[0].mxu0 %v266
        %v667 = vpop.f32.mrb[0].mxu0
        %v668 = vadd.f32 %v369, %v667
        %v669 = vpop.f32.mrb[0].mxu0
        %670 = vmatprep.mubr.f32.mxu0 0.0
        %671 = vmatmul.mubr.f32.gmra.mrb[0].mxu0 %v267
        %v672 = vpop.f32.mrb[0].mxu0
        %v673 = vadd.f32 %v369, %v672
        %v674 = vpop.f32.mrb[0].mxu0
        %675 = vmatprep.mubr.f32.mxu0 0.0
        %676 = vmatmul.mubr.f32.gmra.mrb[0].mxu0 %v268
        %v677 = vpop.f32.mrb[0].mxu0
        %v678 = vadd.f32 %v369, %v677
        %v679 = vpop.f32.mrb[0].mxu0
        %680 = vmatprep.mubr.f32.mxu0 0.0
        %681 = vmatmul.mubr.f32.gmra.mrb[0].mxu0 %v269
        %v682 = vpop.f32.mrb[0].mxu0
        %v683 = vadd.f32 %v369, %v682
        %v684 = vpop.f32.mrb[0].mxu0
        %685 = vmatprep.mubr.f32.mxu0 0.0
        %686 = vmatmul.mubr.f32.gmra.mrb[0].mxu0 %v270
        %v687 = vpop.f32.mrb[0].mxu0
        %v688 = vadd.f32 %v369, %v687
        %v689 = vpop.f32.mrb[0].mxu0
        %690 = vmatprep.mubr.f32.mxu0 0.0
        %691 = vmatmul.mubr.f32.gmra.mrb[0].mxu0 %v271
        %v692 = vpop.f32.mrb[0].mxu0
        %v693 = vadd.f32 %v369, %v692
        %v694 = vpop.f32.mrb[0].mxu0
        %695 = vmatprep.mubr.f32.mxu0 0.0
        %696 = vmatmul.mubr.f32.gmra.mrb[0].mxu0 %v272
        %v697 = vpop.f32.mrb[0].mxu0
        %v698 = vadd.f32 %v369, %v697
        %v699 = vpop.f32.mrb[0].mxu0
        %700 = vmatprep.mubr.f32.mxu0 0.0
        %701 = vmatmul.mubr.f32.gmra.mrb[0].mxu0 %v273
        %v702 = vpop.f32.mrb[0].mxu0
        %v703 = vadd.f32 %v369, %v702
        %v704 = vpop.f32.mrb[0].mxu0
        %705 = vmatprep.mubr.f32.mxu0 0.0
        %706 = vmatmul.mubr.f32.gmra.mrb[0].mxu0 %v274
        %v707 = vpop.f32.mrb[0].mxu0
        %v708 = vadd.f32 %v369, %v707
        %v709 = vpop.f32.mrb[0].mxu0
        %710 = vmatprep.mubr.f32.mxu0 0.0
        %711 = vmatmul.mubr.f32.gmra.mrb[0].mxu0 %v275
        %v712 = vpop.f32.mrb[0].mxu0
        %v713 = vadd.f32 %v369, %v712
        %v714 = vpop.f32.mrb[0].mxu0
        %715 = vmatprep.mubr.f32.mxu0 0.0
        %716 = vmatmul.mubr.f32.gmra.mrb[0].mxu0 %v276
        %v717 = vpop.f32.mrb[0].mxu0
        %v718 = vadd.f32 %v369, %v717
        %v719 = vpop.f32.mrb[0].mxu0
        %720 = vmatprep.mubr.f32.mxu0 0.0
        %721 = vmatmul.mubr.f32.gmra.mrb[0].mxu0 %v277
        %v722 = vpop.f32.mrb[0].mxu0
        %v723 = vadd.f32 %v369, %v722
        %v724 = vpop.f32.mrb[0].mxu0
        %725 = vmatprep.mubr.f32.mxu0 0.0
        %726 = vmatmul.mubr.f32.gmra.mrb[0].mxu0 %v278
        %v727 = vpop.f32.mrb[0].mxu0
        %v728 = vadd.f32 %v369, %v727
        %v729 = vpop.f32.mrb[0].mxu0
        %730 = vmatprep.mubr.f32.mxu0 0.0
        %731 = vmatmul.mubr.f32.gmra.mrb[0].mxu0 %v279
        %v732 = vpop.f32.mrb[0].mxu0
        %v733 = vadd.f32 %v369, %v732
        %v734 = vpop.f32.mrb[0].mxu0
        %735 = vmatprep.mubr.f32.mxu0 0.0
        %736 = vmatmul.mubr.f32.gmra.mrb[0].mxu0 %v280
        %v737 = vpop.f32.mrb[0].mxu0
        %v738 = vadd.f32 %v369, %v737
        %v739 = vpop.f32.mrb[0].mxu0
        %740 = vmatprep.mubr.f32.mxu0 0.0
        %741 = vmatmul.mubr.f32.gmra.mrb[0].mxu0 %v281
        %v742 = vpop.f32.mrb[0].mxu0
        %v743 = vadd.f32 %v369, %v742
        %v744 = vpop.f32.mrb[0].mxu0
        %745 = vmatprep.mubr.f32.mxu0 0.0
        %746 = vmatmul.mubr.f32.gmra.mrb[0].mxu0 %v282
        %v747 = vpop.f32.mrb[0].mxu0
        %v748 = vadd.f32 %v369, %v747
        %v749 = vpop.f32.mrb[0].mxu0
        %750 = vmatprep.mubr.f32.mxu0 0.0
        %751 = vmatmul.mubr.f32.gmra.mrb[0].mxu0 %v283
        %v752 = vpop.f32.mrb[0].mxu0
        %v753 = vadd.f32 %v369, %v752
        %v754 = vpop.f32.mrb[0].mxu0
        %755 = vmatprep.mubr.f32.mxu0 0.0
        %756 = vmatmul.mubr.f32.gmra.mrb[0].mxu0 %v284
        %v757 = vpop.f32.mrb[0].mxu0
        %v758 = vadd.f32 %v369, %v757
        %v759 = vpop.f32.mrb[0].mxu0
        %760 = vmatprep.mubr.f32.mxu0 0.0
        %761 = vmatmul.mubr.f32.gmra.mrb[0].mxu0 %v285
        %v762 = vpop.f32.mrb[0].mxu0
        %v763 = vadd.f32 %v369, %v762
        %v764 = vpop.f32.mrb[0].mxu0
        %765 = vmatprep.mubr.f32.mxu0 0.0
        %766 = vmatmul.mubr.f32.gmra.mrb[0].mxu0 %v286
        %v767 = vpop.f32.mrb[0].mxu0
        %v768 = vadd.f32 %v369, %v767
        %v769 = vpop.f32.mrb[0].mxu0
        %770 = vmatprep.mubr.f32.mxu0 0.0
        %771 = vmatmul.mubr.f32.gmra.mrb[0].mxu0 %v287
        %v772 = vpop.f32.mrb[0].mxu0
        %v773 = vadd.f32 %v369, %v772
        %v774 = vpop.f32.mrb[0].mxu0
        %775 = vmatprep.mubr.f32.mxu0 0.0
        %776 = vmatmul.mubr.f32.gmra.mrb[0].mxu0 %v288
        %v777 = vpop.f32.mrb[0].mxu0
        %v778 = vadd.f32 %v369, %v777
        %v779 = vpop.f32.mrb[0].mxu0
        %780 = vmatprep.mubr.f32.mxu0 0.0
        %781 = vmatmul.mubr.f32.gmra.mrb[0].mxu0 %v289
        %v782 = vpop.f32.mrb[0].mxu0
        %v783 = vadd.f32 %v369, %v782
        %v784 = vpop.f32.mrb[0].mxu0
        %785 = vmatprep.mubr.f32.mxu0 0.0
        %786 = vmatmul.mubr.f32.gmra.mrb[0].mxu0 %v290
        %v787 = vpop.f32.mrb[0].mxu0
        %v788 = vadd.f32 %v369, %v787
        %v789 = vpop.f32.mrb[0].mxu0
        %790 = vmatprep.mubr.f32.mxu0 0.0
        %791 = vmatmul.mubr.f32.gmra.mrb[0].mxu0 %v291
        %v792 = vpop.f32.mrb[0].mxu0
        %v793 = vadd.f32 %v369, %v792
        %v794 = vpop.f32.mrb[0].mxu0
        %795 = vmatprep.mubr.f32.mxu0 0.0
        %796 = vmatmul.mubr.f32.gmra.mrb[0].mxu0 %v292
        %v797 = vpop.f32.mrb[0].mxu0
        %v798 = vadd.f32 %v369, %v797
        %v799 = vpop.f32.mrb[0].mxu0
        %800 = vmatprep.mubr.f32.mxu0 0.0
        %801 = vmatmul.mubr.f32.gmra.mrb[0].mxu0 %v293
        %v802 = vpop.f32.mrb[0].mxu0
        %v803 = vadd.f32 %v369, %v802
        %v804 = vpop.f32.mrb[0].mxu0
        %805 = vmatprep.mubr.f32.mxu0 0.0
        %806 = vmatmul.mubr.f32.gmra.mrb[0].mxu0 %v294
        %v807 = vpop.f32.mrb[0].mxu0
        %v808 = vadd.f32 %v369, %v807
        %v809 = vpop.f32.mrb[0].mxu0
        %810 = vmatprep.mubr.f32.mxu0 0.0
        %811 = vmatmul.mubr.f32.gmra.mrb[0].mxu0 %v295
        %v812 = vpop.f32.mrb[0].mxu0
        %v813 = vadd.f32 %v369, %v812
        %v814 = vpop.f32.mrb[0].mxu0
        %815 = vmatprep.mubr.f32.mxu0 0.0
        %816 = vmatmul.mubr.f32.gmra.mrb[0].mxu0 %v296
        %v817 = vpop.f32.mrb[0].mxu0
        %v818 = vadd.f32 %v369, %v817
        %v819 = vpop.f32.mrb[0].mxu0
        %820 = vmatprep.mubr.f32.mxu0 0.0
        %821 = vmatmul.mubr.f32.gmra.mrb[0].mxu0 %v297
        %v822 = vpop.f32.mrb[0].mxu0
        %v823 = vadd.f32 %v369, %v822
        %v824 = vpop.f32.mrb[0].mxu0
        %825 = vmatprep.mubr.f32.mxu0 0.0
        %826 = vmatmul.mubr.f32.gmra.mrb[0].mxu0 %v298
        %v827 = vpop.f32.mrb[0].mxu0
        %v828 = vadd.f32 %v369, %v827
        %v829 = vpop.f32.mrb[0].mxu0
        %830 = vmatprep.mubr.f32.mxu0 0.0
        %831 = vmatmul.mubr.f32.gmra.mrb[0].mxu0 %v299
        %v832 = vpop.f32.mrb[0].mxu0
        %v833 = vadd.f32 %v369, %v832
        %v834 = vpop.f32.mrb[0].mxu0
        %835 = vmatprep.mubr.f32.mxu0 0.0
        %836 = vmatmul.mubr.f32.gmra.mrb[0].mxu0 %v300
        %v837 = vpop.f32.mrb[0].mxu0
        %v838 = vadd.f32 %v369, %v837
        %v839 = vpop.f32.mrb[0].mxu0
        %840 = vmatprep.mubr.f32.mxu0 0.0
        %841 = vmatmul.mubr.f32.gmra.mrb[0].mxu0 %v301
        %v842 = vpop.f32.mrb[0].mxu0
        %v843 = vadd.f32 %v369, %v842
        %v844 = vpop.f32.mrb[0].mxu0
        %845 = vmatprep.mubr.f32.mxu0 0.0
        %846 = vmatmul.mubr.f32.gmra.mrb[0].mxu0 %v302
        %v847 = vpop.f32.mrb[0].mxu0
        %v848 = vadd.f32 %v369, %v847
        %v849 = vpop.f32.mrb[0].mxu0
        %850 = vmatprep.mubr.f32.mxu0 0.0
        %851 = vmatmul.mubr.f32.gmra.mrb[0].mxu0 %v303
        %v852 = vpop.f32.mrb[0].mxu0
        %v853 = vadd.f32 %v369, %v852
        %v854 = vpop.f32.mrb[0].mxu0
        %855 = vmatprep.mubr.f32.mxu0 0.0
        %856 = vmatmul.mubr.f32.gmra.mrb[0].mxu0 %v304
        %v857 = vpop.f32.mrb[0].mxu0
        %v858 = vadd.f32 %v369, %v857
        %v859 = vpop.f32.mrb[0].mxu0
        %860 = vmatprep.mubr.f32.mxu0 0.0
        %861 = vmatmul.mubr.f32.gmra.mrb[0].mxu0 %v305
        %v862 = vpop.f32.mrb[0].mxu0
        %v863 = vadd.f32 %v369, %v862
        %v864 = vpop.f32.mrb[0].mxu0
        %865 = vmatprep.mubr.f32.mxu0 0.0
        %866 = vmatmul.mubr.f32.gmra.mrb[0].mxu0 %v306
        %v867 = vpop.f32.mrb[0].mxu0
        %v868 = vadd.f32 %v369, %v867
        %v869 = vpop.f32.mrb[0].mxu0
        %870 = vmatprep.mubr.f32.mxu0 0.0
        %871 = vmatmul.mubr.f32.gmra.mrb[0].mxu0 %v307
        %v872 = vpop.f32.mrb[0].mxu0
        %v873 = vadd.f32 %v369, %v872
        %v874 = vpop.f32.mrb[0].mxu0
        %875 = vmatprep.mubr.f32.mxu0 0.0
        %876 = vmatmul.mubr.f32.gmra.mrb[0].mxu0 %v308
        %v877 = vpop.f32.mrb[0].mxu0
        %v878 = vadd.f32 %v369, %v877
        %v879 = vpop.f32.mrb[0].mxu0
        %880 = vmatprep.mubr.f32.mxu0 0.0
        %881 = vmatmul.mubr.f32.gmra.mrb[0].mxu0 %v309
        %v882 = vpop.f32.mrb[0].mxu0
        %v883 = vadd.f32 %v369, %v882
        %v884 = vpop.f32.mrb[0].mxu0
        %885 = vmatprep.mubr.f32.mxu0 0.0
        %886 = vmatmul.mubr.f32.gmra.mrb[0].mxu0 %v310
        %v887 = vpop.f32.mrb[0].mxu0
        %v888 = vadd.f32 %v369, %v887
        %v889 = vpop.f32.mrb[0].mxu0
        %890 = vmatprep.mubr.f32.mxu0 0.0
        %891 = vmatmul.mubr.f32.gmra.mrb[0].mxu0 %v311
        %v892 = vpop.f32.mrb[0].mxu0
        %v893 = vadd.f32 %v369, %v892
        %v894 = vpop.f32.mrb[0].mxu0
        %895 = vmatprep.mubr.f32.mxu0 0.0
        %896 = vmatmul.mubr.f32.gmra.mrb[0].mxu0 %v312
        %v897 = vpop.f32.mrb[0].mxu0
        %v898 = vadd.f32 %v369, %v897
        %v899 = vpop.f32.mrb[0].mxu0
        %900 = vmatprep.mubr.f32.mxu0 0.0
        %901 = vmatmul.mubr.f32.gmra.mrb[0].mxu0 %v313
        %v902 = vpop.f32.mrb[0].mxu0
        %v903 = vadd.f32 %v369, %v902
        %v904 = vpop.f32.mrb[0].mxu0
        %905 = vmatprep.mubr.f32.mxu0 0.0
        %906 = vmatmul.mubr.f32.gmra.mrb[0].mxu0 %v314
        %v907 = vpop.f32.mrb[0].mxu0
        %v908 = vadd.f32 %v369, %v907
        %v909 = vpop.f32.mrb[0].mxu0
        %910 = vmatprep.mubr.f32.mxu0 0.0
        %911 = vmatmul.mubr.f32.gmra.mrb[0].mxu0 %v315
        %v912 = vpop.f32.mrb[0].mxu0
        %v913 = vadd.f32 %v369, %v912
        %v914 = vpop.f32.mrb[0].mxu0
        %915 = vmatprep.mubr.f32.mxu0 0.0
        %916 = vmatmul.mubr.f32.gmra.mrb[0].mxu0 %v316
        %v917 = vpop.f32.mrb[0].mxu0
        %v918 = vadd.f32 %v369, %v917
        %v919 = vpop.f32.mrb[0].mxu0
        %920 = vmatprep.mubr.f32.mxu0 0.0
        %921 = vmatmul.mubr.f32.gmra.mrb[0].mxu0 %v317
        %v922 = vpop.f32.mrb[0].mxu0
        %v923 = vadd.f32 %v369, %v922
        %v924 = vpop.f32.mrb[0].mxu0
        %925 = vmatprep.mubr.f32.mxu0 0.0
        %926 = vmatmul.mubr.f32.gmra.mrb[0].mxu0 %v318
        %v927 = vpop.f32.mrb[0].mxu0
        %v928 = vadd.f32 %v369, %v927
        %v929 = vpop.f32.mrb[0].mxu0
        %930 = vmatprep.mubr.f32.mxu0 0.0
        %931 = vmatmul.mubr.f32.gmra.mrb[0].mxu0 %v319
        %v932 = vpop.f32.mrb[0].mxu0
        %v933 = vadd.f32 %v369, %v932
        %v934 = vpop.f32.mrb[0].mxu0
        %935 = vmatprep.mubr.f32.mxu0 0.0
        %936 = vmatmul.mubr.f32.gmra.mrb[0].mxu0 %v320
        %v937 = vpop.f32.mrb[0].mxu0
        %v938 = vadd.f32 %v369, %v937
        %v939 = vpop.f32.mrb[0].mxu0
        %940 = vmatprep.mubr.f32.mxu0 0.0
        %941 = vmatmul.mubr.f32.gmra.mrb[0].mxu0 %v321
        %v942 = vpop.f32.mrb[0].mxu0
        %v943 = vadd.f32 %v369, %v942
        %v944 = vpop.f32.mrb[0].mxu0
        %945 = vmatprep.mubr.f32.mxu0 0.0
        %946 = vmatmul.mubr.f32.gmra.mrb[0].mxu0 %v322
        %v947 = vpop.f32.mrb[0].mxu0
        %v948 = vadd.f32 %v369, %v947
        %v949 = vpop.f32.mrb[0].mxu0
        %950 = vmatprep.mubr.f32.mxu0 0.0
        %951 = vmatmul.mubr.f32.gmra.mrb[0].mxu0 %v323
        %v952 = vpop.f32.mrb[0].mxu0
        %v953 = vadd.f32 %v369, %v952
        %v954 = vpop.f32.mrb[0].mxu0
        %955 = vmatprep.mubr.f32.mxu0 0.0
        %956 = vmatmul.mubr.f32.gmra.mrb[0].mxu0 %v324
        %v957 = vpop.f32.mrb[0].mxu0
        %v958 = vadd.f32 %v369, %v957
        %v959 = vpop.f32.mrb[0].mxu0
        %960 = vmatprep.mubr.f32.mxu0 0.0
        %961 = vmatmul.mubr.f32.gmra.mrb[0].mxu0 %v325
        %v962 = vpop.f32.mrb[0].mxu0
        %v963 = vadd.f32 %v369, %v962
        %v964 = vpop.f32.mrb[0].mxu0
        %965 = vmatprep.mubr.f32.mxu0 0.0
        %966 = vmatmul.mubr.f32.gmra.mrb[0].mxu0 %v326
        %v967 = vpop.f32.mrb[0].mxu0
        %v968 = vadd.f32 %v369, %v967
        %v969 = vpop.f32.mrb[0].mxu0
        %970 = vmatprep.mubr.f32.mxu0 0.0
        %971 = vmatmul.mubr.f32.gmra.mrb[0].mxu0 %v327
        %v972 = vpop.f32.mrb[0].mxu0
        %v973 = vadd.f32 %v369, %v972
        %v974 = vpop.f32.mrb[0].mxu0
        %975 = vmatprep.mubr.f32.mxu0 0.0
        %976 = vmatmul.mubr.f32.gmra.mrb[0].mxu0 %v328
        %v977 = vpop.f32.mrb[0].mxu0
        %v978 = vadd.f32 %v369, %v977
        %v979 = vpop.f32.mrb[0].mxu0
        %980 = vmatprep.mubr.f32.mxu0 0.0
        %981 = vmatmul.mubr.f32.gmra.mrb[0].mxu0 %v329
        %v982 = vpop.f32.mrb[0].mxu0
        %v983 = vadd.f32 %v369, %v982
        %v984 = vpop.f32.mrb[0].mxu0
        %985 = vmatprep.mubr.f32.mxu0 0.0
        %986 = vmatmul.mubr.f32.gmra.mrb[0].mxu0 %v330
        %v987 = vpop.f32.mrb[0].mxu0
        %v988 = vadd.f32 %v369, %v987
        %v989 = vpop.f32.mrb[0].mxu0
        %990 = vmatprep.mubr.f32.mxu0 0.0
        %991 = vmatmul.mubr.f32.gmra.mrb[0].mxu0 %v331
        %v992 = vpop.f32.mrb[0].mxu0
        %v993 = vadd.f32 %v369, %v992
        %v994 = vpop.f32.mrb[0].mxu0
        %995 = vmatprep.mubr.f32.mxu0 0.0
        %996 = vmatmul.mubr.f32.gmra.mrb[0].mxu0 %v332
        %v997 = vpop.f32.mrb[0].mxu0
        %v998 = vadd.f32 %v369, %v997
        %v999 = vpop.f32.mrb[0].mxu0
        %1000 = vmatprep.mubr.f32.mxu0 0.0
        %1001 = vmatmul.mubr.f32.gmra.mrb[0].mxu0 %v333
        %v1002 = vpop.f32.mrb[0].mxu0
        %v1003 = vadd.f32 %v369, %v1002
        %v1004 = vpop.f32.mrb[0].mxu0
        %1005 = vmatprep.mubr.f32.mxu0 0.0
        %1006 = vmatmul.mubr.f32.gmra.mrb[0].mxu0 %v334
        %v1007 = vpop.f32.mrb[0].mxu0
        %v1008 = vadd.f32 %v369, %v1007
        %v1009 = vpop.f32.mrb[0].mxu0
        %1010 = vmatprep.mubr.f32.mxu0 0.0
        %1011 = vmatmul.mubr.f32.gmra.mrb[0].mxu0 %v335
        %v1012 = vpop.f32.mrb[0].mxu0
        %v1013 = vadd.f32 %v369, %v1012
        %v1014 = vpop.f32.mrb[0].mxu0
        %1015 = vmatprep.mubr.f32.mxu0 0.0
        %1016 = vmatmul.mubr.f32.gmra.mrb[0].mxu0 %v336
        %v1017 = vpop.f32.mrb[0].mxu0
        %v1018 = vadd.f32 %v369, %v1017
        %v1019 = vpop.f32.mrb[0].mxu0
        %1020 = vmatprep.mubr.f32.mxu0 0.0
        %1021 = vmatmul.mubr.f32.gmra.mrb[0].mxu0 %v337
        %v1022 = vpop.f32.mrb[0].mxu0
        %v1023 = vadd.f32 %v369, %v1022
        %v1024 = vpop.f32.mrb[0].mxu0
        %1025 = vmatprep.mubr.f32.mxu0 0.0
        %1026 = vmatmul.mubr.f32.gmra.mrb[0].mxu0 %v338
        %v1027 = vpop.f32.mrb[0].mxu0
        %v1028 = vadd.f32 %v369, %v1027
        %v1029 = vpop.f32.mrb[0].mxu0
        %1030 = vmatprep.mubr.f32.mxu0 0.0
        %1031 = vmatmul.mubr.f32.gmra.mrb[0].mxu0 %v339
        %v1032 = vpop.f32.mrb[0].mxu0
        %v1033 = vadd.f32 %v369, %v1032
        %v1034 = vpop.f32.mrb[0].mxu0
        %1035 = vmatprep.mubr.f32.mxu0 0.0
        %1036 = vmatmul.mubr.f32.gmra.mrb[0].mxu0 %v340
        %v1037 = vpop.f32.mrb[0].mxu0
        %v1038 = vadd.f32 %v369, %v1037
        %v1039 = vpop.f32.mrb[0].mxu0
        %1040 = vmatprep.mubr.f32.mxu0 0.0
        %1041 = vmatmul.mubr.f32.gmra.mrb[0].mxu0 %v341
        %v1042 = vpop.f32.mrb[0].mxu0
        %v1043 = vadd.f32 %v369, %v1042
        %v1044 = vpop.f32.mrb[0].mxu0
        %1045 = vmatprep.mubr.f32.mxu0 0.0
        %1046 = vmatmul.mubr.f32.gmra.mrb[0].mxu0 %v342
        %v1047 = vpop.f32.mrb[0].mxu0
        %v1048 = vadd.f32 %v369, %v1047
        %v1049 = vpop.f32.mrb[0].mxu0
        %1050 = vmatprep.mubr.f32.mxu0 0.0
        %1051 = vmatmul.mubr.f32.gmra.mrb[0].mxu0 %v343
        %v1052 = vpop.f32.mrb[0].mxu0
        %v1053 = vadd.f32 %v369, %v1052
        %v1054 = vpop.f32.mrb[0].mxu0
        %1055 = vmatprep.mubr.f32.mxu0 0.0
        %1056 = vmatmul.mubr.f32.gmra.mrb[0].mxu0 %v344
        %v1057 = vpop.f32.mrb[0].mxu0
        %v1058 = vadd.f32 %v369, %v1057
        %v1059 = vpop.f32.mrb[0].mxu0
        %1060 = vmatprep.mubr.f32.mxu0 0.0
        %1061 = vmatmul.mubr.f32.gmra.mrb[0].mxu0 %v345
        %v1062 = vpop.f32.mrb[0].mxu0
        %v1063 = vadd.f32 %v369, %v1062
        %v1064 = vpop.f32.mrb[0].mxu0
        %1065 = vmatprep.mubr.f32.mxu0 0.0
        %1066 = vmatmul.mubr.f32.gmra.mrb[0].mxu0 %v346
        %v1067 = vpop.f32.mrb[0].mxu0
        %v1068 = vadd.f32 %v369, %v1067
        %v1069 = vpop.f32.mrb[0].mxu0
        %1070 = vmatprep.mubr.f32.mxu0 0.0
        %1071 = vmatmul.mubr.f32.gmra.mrb[0].mxu0 %v347
        %v1072 = vpop.f32.mrb[0].mxu0
        %v1073 = vadd.f32 %v369, %v1072
        %v1074 = vpop.f32.mrb[0].mxu0
        %1075 = vdwg.mxu0
        %1076 = vst [vmem:[%s209] sm:$0xff] %v438
        %1077 = vst [vmem:[%s209 + $0x8] sm:$0xff] %v443
        %1078 = vst [vmem:[%s209 + $0x10] sm:$0xff] %v448
        %1079 = vst [vmem:[%s209 + $0x18] sm:$0xff] %v453
        %1080 = vst [vmem:[%s209 + $0x20] sm:$0xff] %v458
        %1081 = vst [vmem:[%s209 + $0x28] sm:$0xff] %v463
        %1082 = vst [vmem:[%s209 + $0x30] sm:$0xff] %v468
        %1083 = vst [vmem:[%s209 + $0x38] sm:$0xff] %v473
        %1084 = vst [vmem:[%s209 + $0x40] sm:$0xff] %v478
        %1085 = vst [vmem:[%s209 + $0x48] sm:$0xff] %v483
        %1086 = vst [vmem:[%s209 + $0x50] sm:$0xff] %v488
        %1087 = vst [vmem:[%s209 + $0x58] sm:$0xff] %v493
        %1088 = vst [vmem:[%s209 + $0x60] sm:$0xff] %v498
        %1089 = vst [vmem:[%s209 + $0x68] sm:$0xff] %v503
        %1090 = vst [vmem:[%s209 + $0x70] sm:$0xff] %v508
        %1091 = vst [vmem:[%s209 + $0x78] sm:$0xff] %v513
        %1092 = vst [vmem:[%s209 + $0x80] sm:$0xff] %v518
        %1093 = vst [vmem:[%s209 + $0x88] sm:$0xff] %v523
        %1094 = vst [vmem:[%s209 + $0x90] sm:$0xff] %v528
        %1095 = vst [vmem:[%s209 + $0x98] sm:$0xff] %v533
        %1096 = vst [vmem:[%s209 + $0xa0] sm:$0xff] %v538
        %1097 = vst [vmem:[%s209 + $0xa8] sm:$0xff] %v543
        %1098 = vst [vmem:[%s209 + $0xb0] sm:$0xff] %v548
        %1099 = vst [vmem:[%s209 + $0xb8] sm:$0xff] %v553
        %1100 = vst [vmem:[%s209 + $0xc0] sm:$0xff] %v558
        %1101 = vst [vmem:[%s209 + $0xc8] sm:$0xff] %v563
        %1102 = vst [vmem:[%s209 + $0xd0] sm:$0xff] %v568
        %1103 = vst [vmem:[%s209 + $0xd8] sm:$0xff] %v573
        %1104 = vst [vmem:[%s209 + $0xe0] sm:$0xff] %v578
        %1105 = vst [vmem:[%s209 + $0xe8] sm:$0xff] %v583
        %1106 = vst [vmem:[%s209 + $0xf0] sm:$0xff] %v588
        %1107 = vst [vmem:[%s209 + $0xf8] sm:$0xff] %v593
        %1108 = vst [vmem:[%s209 + $0x100] sm:$0xff] %v598
        %1109 = vst [vmem:[%s209 + $0x108] sm:$0xff] %v603
        %1110 = vst [vmem:[%s209 + $0x110] sm:$0xff] %v608
        %1111 = vst [vmem:[%s209 + $0x118] sm:$0xff] %v613
        %1112 = vst [vmem:[%s209 + $0x120] sm:$0xff] %v618
        %1113 = vst [vmem:[%s209 + $0x128] sm:$0xff] %v623
        %1114 = vst [vmem:[%s209 + $0x130] sm:$0xff] %v628
        %1115 = vst [vmem:[%s209 + $0x138] sm:$0xff] %v633
        %1116 = vst [vmem:[%s209 + $0x140] sm:$0xff] %v638
        %1117 = vst [vmem:[%s209 + $0x148] sm:$0xff] %v643
        %1118 = vst [vmem:[%s209 + $0x150] sm:$0xff] %v648
        %1119 = vst [vmem:[%s209 + $0x158] sm:$0xff] %v653
        %1120 = vst [vmem:[%s209 + $0x160] sm:$0xff] %v658
        %1121 = vst [vmem:[%s209 + $0x168] sm:$0xff] %v663
        %1122 = vst [vmem:[%s209 + $0x170] sm:$0xff] %v668
        %1123 = vst [vmem:[%s209 + $0x178] sm:$0xff] %v673
        %1124 = vst [vmem:[%s209 + $0x180] sm:$0xff] %v678
        %1125 = vst [vmem:[%s209 + $0x188] sm:$0xff] %v683
        %1126 = vst [vmem:[%s209 + $0x190] sm:$0xff] %v688
        %1127 = vst [vmem:[%s209 + $0x198] sm:$0xff] %v693
        %1128 = vst [vmem:[%s209 + $0x1a0] sm:$0xff] %v698
        %1129 = vst [vmem:[%s209 + $0x1a8] sm:$0xff] %v703
        %1130 = vst [vmem:[%s209 + $0x1b0] sm:$0xff] %v708
        %1131 = vst [vmem:[%s209 + $0x1b8] sm:$0xff] %v713
        %1132 = vst [vmem:[%s209 + $0x1c0] sm:$0xff] %v718
        %1133 = vst [vmem:[%s209 + $0x1c8] sm:$0xff] %v723
        %1134 = vst [vmem:[%s209 + $0x1d0] sm:$0xff] %v728
        %1135 = vst [vmem:[%s209 + $0x1d8] sm:$0xff] %v733
        %1136 = vst [vmem:[%s209 + $0x1e0] sm:$0xff] %v738
        %1137 = vst [vmem:[%s209 + $0x1e8] sm:$0xff] %v743
        %1138 = vst [vmem:[%s209 + $0x1f0] sm:$0xff] %v748
        %1139 = vst [vmem:[%s209 + $0x1f8] sm:$0xff] %v753
        %1140 = vst [vmem:[%s209 + $0x200] sm:$0xff] %v758
        %1141 = vst [vmem:[%s209 + $0x208] sm:$0xff] %v763
        %1142 = vst [vmem:[%s209 + $0x210] sm:$0xff] %v768
        %1143 = vst [vmem:[%s209 + $0x218] sm:$0xff] %v773
        %1144 = vst [vmem:[%s209 + $0x220] sm:$0xff] %v778
        %1145 = vst [vmem:[%s209 + $0x228] sm:$0xff] %v783
        %1146 = vst [vmem:[%s209 + $0x230] sm:$0xff] %v788
        %1147 = vst [vmem:[%s209 + $0x238] sm:$0xff] %v793
        %1148 = vst [vmem:[%s209 + $0x240] sm:$0xff] %v798
        %1149 = vst [vmem:[%s209 + $0x248] sm:$0xff] %v803
        %1150 = vst [vmem:[%s209 + $0x250] sm:$0xff] %v808
        %1151 = vst [vmem:[%s209 + $0x258] sm:$0xff] %v813
        %1152 = vst [vmem:[%s209 + $0x260] sm:$0xff] %v818
        %1153 = vst [vmem:[%s209 + $0x268] sm:$0xff] %v823
        %1154 = vst [vmem:[%s209 + $0x270] sm:$0xff] %v828
        %1155 = vst [vmem:[%s209 + $0x278] sm:$0xff] %v833
        %1156 = vst [vmem:[%s209 + $0x280] sm:$0xff] %v838
        %1157 = vst [vmem:[%s209 + $0x288] sm:$0xff] %v843
        %1158 = vst [vmem:[%s209 + $0x290] sm:$0xff] %v848
        %1159 = vst [vmem:[%s209 + $0x298] sm:$0xff] %v853
        %1160 = vst [vmem:[%s209 + $0x2a0] sm:$0xff] %v858
        %1161 = vst [vmem:[%s209 + $0x2a8] sm:$0xff] %v863
        %1162 = vst [vmem:[%s209 + $0x2b0] sm:$0xff] %v868
        %1163 = vst [vmem:[%s209 + $0x2b8] sm:$0xff] %v873
        %1164 = vst [vmem:[%s209 + $0x2c0] sm:$0xff] %v878
        %1165 = vst [vmem:[%s209 + $0x2c8] sm:$0xff] %v883
        %1166 = vst [vmem:[%s209 + $0x2d0] sm:$0xff] %v888
        %1167 = vst [vmem:[%s209 + $0x2d8] sm:$0xff] %v893
        %1168 = vst [vmem:[%s209 + $0x2e0] sm:$0xff] %v898
        %1169 = vst [vmem:[%s209 + $0x2e8] sm:$0xff] %v903
        %1170 = vst [vmem:[%s209 + $0x2f0] sm:$0xff] %v908
        %1171 = vst [vmem:[%s209 + $0x2f8] sm:$0xff] %v913
        %1172 = vst [vmem:[%s209 + $0x300] sm:$0xff] %v918
        %1173 = vst [vmem:[%s209 + $0x308] sm:$0xff] %v923
        %1174 = vst [vmem:[%s209 + $0x310] sm:$0xff] %v928
        %1175 = vst [vmem:[%s209 + $0x318] sm:$0xff] %v933
        %1176 = vst [vmem:[%s209 + $0x320] sm:$0xff] %v938
        %1177 = vst [vmem:[%s209 + $0x328] sm:$0xff] %v943
        %1178 = vst [vmem:[%s209 + $0x330] sm:$0xff] %v948
        %1179 = vst [vmem:[%s209 + $0x338] sm:$0xff] %v953
        %1180 = vst [vmem:[%s209 + $0x340] sm:$0xff] %v958
        %1181 = vst [vmem:[%s209 + $0x348] sm:$0xff] %v963
        %1182 = vst [vmem:[%s209 + $0x350] sm:$0xff] %v968
        %1183 = vst [vmem:[%s209 + $0x358] sm:$0xff] %v973
        %1184 = vst [vmem:[%s209 + $0x360] sm:$0xff] %v978
        %1185 = vst [vmem:[%s209 + $0x368] sm:$0xff] %v983
        %1186 = vst [vmem:[%s209 + $0x370] sm:$0xff] %v988
        %1187 = vst [vmem:[%s209 + $0x378] sm:$0xff] %v993
        %1188 = vst [vmem:[%s209 + $0x380] sm:$0xff] %v998
        %1189 = vst [vmem:[%s209 + $0x388] sm:$0xff] %v1003
        %1190 = vst [vmem:[%s209 + $0x390] sm:$0xff] %v1008
        %1191 = vst [vmem:[%s209 + $0x398] sm:$0xff] %v1013
        %1192 = vst [vmem:[%s209 + $0x3a0] sm:$0xff] %v1018
        %1193 = vst [vmem:[%s209 + $0x3a8] sm:$0xff] %v1023
        %1194 = vst [vmem:[%s209 + $0x3b0] sm:$0xff] %v1028
        %1195 = vst [vmem:[%s209 + $0x3b8] sm:$0xff] %v1033
        %1196 = vst [vmem:[%s209 + $0x3c0] sm:$0xff] %v1038
        %1197 = vst [vmem:[%s209 + $0x3c8] sm:$0xff] %v1043
        %1198 = vst [vmem:[%s209 + $0x3d0] sm:$0xff] %v1048
        %1199 = vst [vmem:[%s209 + $0x3d8] sm:$0xff] %v1053
        %1200 = vst [vmem:[%s209 + $0x3e0] sm:$0xff] %v1058
        %1201 = vst [vmem:[%s209 + $0x3e8] sm:$0xff] %v1063
        %1202 = vst [vmem:[%s209 + $0x3f0] sm:$0xff] %v1068
        %1203 = vst [vmem:[%s209 + $0x3f8] sm:$0xff] %v1073
        %s1204 = sand.u32 %s97, 1
        %s1205 = scalar_lea.sflag [#allocation4], %s1204
        %s1206 = sand.u32 %s97, 1
        %s1207 = smul.addr %s1206, 1024
        %s1208 = scalar_lea.vmem [#allocation7], %s1207
        // Predicated region
        $region41: #{tpu_custom_call.1} parent=31 // pred_check
          %p1209 = pneg %p107
        $region42: #{tpu_custom_call.1} parent=31 // pred_check_branch
          %1211 = sbr.rel (%p1209) target = $region44
        $region43: #{tpu_custom_call.1} parent=31 // pred_region
          %s1212 = smul.u32 128, %s21
          %s1213 = ssub.s32 160, %s1212
          %p1214 = scmp.lt.s32.totalorder %s1213, 128
          %s1215 = scalar_select %p1214, %s1213, 128
          %s1216 = smul.u32 128, %s1215
          %s1218 = ssub.s32 16384, %s1216
          %1219 = vsyncadd %s1205, %s1218
          %p1220 = scmp.ne.s32.totalorder 0, %s1216
          %s1221 = smul.addr %s1212, 128
          %s1222 = scalar_lea.hbm %s3, %s1221
          %s1223 = smul.u32 8, %s1215
          %s1224 = sshll.u32 %s1208, 4
          %s1225 = int_to_ptr.vmem [resolvable:$true] %s1224
          %s1226 = sshll.u32 %s1223, 4
          %1230 = dma.vmem_to_hbm [thread:$0]  (%p1220), %s1225, %s1226, %s1222, %s1205, 128, 128, 8
        $region44: #{tpu_custom_call.1} parent=31 // pred_fallthru
          _
      $region32: #{tpu_custom_call.1} parent=5 // pred_fallthru
        _
      %p1231 = scmp.le.s32.totalorder 2, %s16
      // Predicated region
      $region45: #{tpu_custom_call.1} parent=5 // pred_check
        %p1232 = pneg %p1231
      $region46: #{tpu_custom_call.1} parent=5 // pred_check_branch
        %1234 = sbr.rel (%p1232) target = $region48
      $region47: #{tpu_custom_call.1} parent=5 // pred_region
        %s1235 = ssub.s32 %s16, 2
        // Predicated region
        $region49: #{tpu_custom_call.1} parent=47 // pred_check
          %p1236 = pneg %p113
        $region50: #{tpu_custom_call.1} parent=47 // pred_check_branch
          %1238 = sbr.rel (%p1236) target = $region52
        $region51: #{tpu_custom_call.1} parent=47 // pred_region
          %s1239 = sand.u32 %s98, 1
          %s1240 = scalar_lea.sflag [#allocation4], %s1239
          %s1241 = sand.u32 %s98, 1
          %s1242 = smul.addr %s1241, 1024
          %s1243 = scalar_lea.vmem [#allocation7], %s1242
          %1244 = dma.done %s1240, 16384
        $region52: #{tpu_custom_call.1} parent=47 // pred_fallthru
          _
      $region48: #{tpu_custom_call.1} parent=5 // pred_fallthru
        _
    $region6: #{tpu_custom_call.1} parent=1 // loop_footer
      %s20 = sadd.s32 1, %s16
    $region7: #{tpu_custom_call.1} parent=1 // loop_footer_branch
      %15 = sbr.rel target = $region3
    $region8: #{tpu_custom_call.1} parent=1 // loop_exit
      _
    %1245 = vsyncpa [#allocation3], 1
    %s1246 = scalar_lea.sflag [#allocation3], 1
    %1247 = vsyncpa %s1246, 1
    %1248 = vsyncpa [#allocation6], 1
    %1249 = vsyncpa [#allocation4], 1
    %s1250 = scalar_lea.sflag [#allocation4], 1
    %1251 = vsyncpa %s1250, 1

</llo_original>
